<compile_context>
chip_gen: v7x
topology: tpu7x:2x2x1
jax: 0.10.0
libtpu: 0.0.40
codegen_flags: <defaults>
</compile_context>

<pallas_src>
import functools

import numpy as np
import jax
import jax.numpy as jnp
from jax import lax
from jax.experimental import pallas as pl
from jax.experimental.pallas import tpu as pltpu

VOXEL_SIZE = 8                     # voxel grid edge (d = h = w)
W_PAD = VOXEL_SIZE + 2             # padded grid edge (torch crops [1:-1,1:-1,1:-1])
V_FLAT = W_PAD ** 3                # 1000
V_PAD = 1024                       # lane-friendly padding of V_FLAT
MIN_DENOMINATOR = 1e-12
TINY = 2e-12


def _round_up(x, m):
    return ((x + m - 1) // m) * m


# ---------------------------------------------------------------------------
# Pallas kernel: one (batch, point-tile) step of the one-hot scatter-mean
# ---------------------------------------------------------------------------
def _voxel_scatter_kernel(ones_row, vals_t_ref, flat_ref, out_ref):
    # vals_t_ref : (1, C_SC, TN) VMEM block.  Rows:
    #                0..2        raw x, y, z
    #                3..3+F-1    image features
    #                3+F         ones (per-point count)
    #                ...         zero pad up to C_SC (sublane multiple of 8)
    # flat_ref   : (1, TN, 1) int32 — flat padded-voxel index per point,
    #              already on sublanes (column), precomputed in the wrapper.
    # out_ref    : (1, C_SC, V_PAD) f32 — accumulated across the point tiles.
    n = pl.program_id(1)
    n_last = pl.num_programs(1) - 1

    @pl.when(n == 0)
    def _init():
        out_ref[...] = jnp.zeros_like(out_ref)

    vt = vals_t_ref[0]                                   # (C_SC, TN)
    flat_col = flat_ref[0]                               # (TN, 1) int32
    tn = vt.shape[1]

    # one-hot built in the MXU-native (K, N) orientation: lane-axis iota over
    # the voxel ids, broadcast-compare against the per-point column.
    iota = lax.broadcasted_iota(jnp.int32, (tn, V_PAD), 1)        # (TN, V_PAD)
    one_hot = jnp.where(iota == flat_col,
                        jnp.float32(1), jnp.float32(0))           # (TN, V_PAD)

    # plain NN matmul: (C_SC, TN) x (TN, V_PAD) -> (C_SC, V_PAD), lane-dense.
    contrib = lax.dot_general(
        vt, one_hot,
        dimension_numbers=(((1,), (0,)), ((), ())),
        preferred_element_type=jnp.float32)
    out_ref[0] = out_ref[0] + contrib

    # scatter_mean on the last point tile: divide by per-voxel count
    @pl.when(n == n_last)
    def _finalize():
        acc = out_ref[0]
        inv = 1.0 / jnp.maximum(acc[ones_row:ones_row + 1, :], 1.0)  # (1, V_PAD)
        out_ref[0] = acc * inv


# ---------------------------------------------------------------------------
# Tile-size / VMEM-limit models (per TPU generation)
# ---------------------------------------------------------------------------
def _tpu_vmem_capacity_bytes():
    try:
        return getattr(pltpu.get_tpu_info(), "vmem_capacity_bytes", 0) or 0
    except Exception:
        return 0


def _point_tile_default(n_points):
    """4096 on 128 MiB-VMEM parts (v5e/v6e), 2048 on 64 MiB parts (v7x)."""
    vmem_bytes = _tpu_vmem_capacity_bytes()
    target = 4096 if vmem_bytes >= (96 << 20) else 2048
    return min(target, max(128, _round_up(n_points, 128)))


def _vmem_limit_bytes(tn, c_sc):
    """Bytes-per-tile model: one-hot + iota + compare slack (each tn*4 KiB),
    double-buffered input/flat blocks, resident output block, margin."""
    big = 3 * tn * V_PAD * 4
    in_blk = 2 * c_sc * tn * 4
    flat_blk = 2 * tn * 512            # (tn,1) int32 padded to (8,128) tiles
    out_blk = c_sc * V_PAD * 4
    total = big + in_blk + flat_blk + out_blk + (4 << 20)
    phys = _tpu_vmem_capacity_bytes() or (128 << 20)
    cap = max(32 << 20, int(phys * 3 // 4))
    return int(max(16 << 20, min(total, cap)))


# ---------------------------------------------------------------------------
# Scatter-mean wrapper (channel-first inputs, no transpose round-trips)
# ---------------------------------------------------------------------------
def _voxel_scatter(coords_cf, feats_cf, bounds, point_tile=None):
    """coords_cf (B,3,N), feats_cf (B,F,N), bounds (B,6) -> (B, C_SC, V_PAD)
    f32 scatter-mean: channels on sublanes, flat padded-voxel index on lanes."""
    B, _, N = coords_cf.shape
    F = feats_cf.shape[1]
    C = 3 + F + 1                       # xyz + features + ones(count)
    ones_row = 3 + F
    c_sc = _round_up(C, 8)              # scattered rows, sublane aligned

    tn = point_tile if point_tile is not None else _point_tile_default(N)
    tn = max(128, _round_up(tn, 128))
    n_pad = _round_up(N, tn)

    coords32 = coords_cf.astype(jnp.float32)
    feats32 = feats_cf.astype(jnp.float32)
    bb_mins = bounds[:, 0:3].astype(jnp.float32)
    bb_maxs = bounds[:, 3:6].astype(jnp.float32)
    res = (bb_maxs - bb_mins) / (jnp.float32(VOXEL_SIZE) + TINY)
    inv_denom = 1.0 / (res + MIN_DENOMINATOR)          # hoisted reciprocal
    shifted = bb_mins - res                             # (B, 3)

    # flat padded-voxel index per point (tiny elementwise pass in the wrapper)
    idx = jnp.floor((coords32 - shifted[:, :, None]) * inv_denom[:, :, None])
    idx = jnp.clip(idx, 0.0, float(W_PAD - 1))
    flat = (idx[:, 0, :] * float(W_PAD * W_PAD)
            + idx[:, 1, :] * float(W_PAD)
            + idx[:, 2, :]).astype(jnp.int32)                      # (B, N)
    flat = jnp.pad(flat, ((0, 0), (0, n_pad - N)))[:, :, None]     # (B, n_pad, 1)

    vals_t = jnp.concatenate(
        [coords32, feats32, jnp.ones((B, 1, N), jnp.float32),
         jnp.zeros((B, c_sc - C, N), jnp.float32)], axis=1)        # (B, c_sc, N)
    # Invariant: padded points have ALL value rows zero (including the count
    # row).  Their one-hot column fires on voxel 0 but adds 0 to every sum and
    # 0 to the count, so voxel 0's mean is unaffected.  Do not change this pad.
    vals_t = jnp.pad(vals_t, ((0, 0), (0, 0), (0, n_pad - N)))

    kernel = functools.partial(_voxel_scatter_kernel, ones_row)
    out = pl.pallas_call(
        kernel,
        out_shape=jax.ShapeDtypeStruct((B, c_sc, V_PAD), jnp.float32),
        grid_spec=pltpu.PrefetchScalarGridSpec(
            num_scalar_prefetch=0,
            grid=(B, n_pad // tn),
            in_specs=[pl.BlockSpec((1, c_sc, tn), lambda b, n: (b, 0, n)),
                      pl.BlockSpec((1, tn, 1), lambda b, n: (b, n, 0))],
            out_specs=pl.BlockSpec((1, c_sc, V_PAD), lambda b, n: (b, 0, 0)),
        ),
        compiler_params=pltpu.CompilerParams(
            dimension_semantics=("parallel", "arbitrary"),
            vmem_limit_bytes=_vmem_limit_bytes(tn, c_sc)),
    )(vals_t, flat)
    return out, ones_row


# ---------------------------------------------------------------------------
# VoxelGrid.coords_to_bounding_voxel_grid equivalent (glue around the kernel)
# Emits channels-first directly: the torch forward's permute(0,4,1,2,3) is
# fused into the kernel's lane-dense (B, C, voxel) output layout.
# ---------------------------------------------------------------------------
def coords_to_bounding_voxel_grid(coords_cf, coord_features_cf, coord_bounds,
                                  point_tile=None):
    B = coords_cf.shape[0]
    mean_t, ones_row = _voxel_scatter(coords_cf, coord_features_cf,
                                      coord_bounds, point_tile=point_tile)
    grid_cf = mean_t[:, :, :V_FLAT].reshape(B, -1, W_PAD, W_PAD, W_PAD)
    vox_cf = grid_cf[:, :, 1:-1, 1:-1, 1:-1]            # crop 1-voxel border

    occupied = (vox_cf[:, ones_row:ones_row + 1] > 0).astype(jnp.float32)

    # hard voxel-location positional encoding (channels-first)
    ar = jnp.arange(VOXEL_SIZE, dtype=jnp.float32)
    index_grid = jnp.stack(jnp.meshgrid(ar, ar, ar, indexing="ij"), axis=0)
    index_grid = index_grid / float(VOXEL_SIZE)
    index_grid = jnp.broadcast_to(index_grid[None], (B,) + index_grid.shape)

    voxel_grid_cf = jnp.concatenate(
        [vox_cf[:, :ones_row], index_grid, occupied], axis=1)   # (B, 3+F+3+1, 8,8,8)
    # NOTE: density here is the post-mean count channel (1.0 if any point hit
    # the voxel, else 0.0), i.e. occupancy — matches the occupancy channel of
    # the returned grid; the torch forward never consumes voxel_density.
    voxel_density_cf = vox_cf[:, ones_row:ones_row + 1]
    return voxel_grid_cf, voxel_density_cf


# ---------------------------------------------------------------------------
# QFunction.forward equivalent
# ---------------------------------------------------------------------------
_COORD_TRANS = jnp.eye(4, dtype=jnp.float32)   # torch: diag([1,1,1,1]); unused here
# TODO(synk): PerceiverIO q-net and NeuralRenderer are constructed in __init__
# but never called in this forward pass, so they are not translated.


def qfunction_forward(rgb_pcd, pcd, bounds, point_tile=None):
    """rgb_pcd: list of (rgb (B,F,H,W), pcd (B,3,H,W)); pcd: list of (B,3,H,W)."""
    b = rgb_pcd[0][0].shape[0]
    # Inputs are already channel-first: flatten spatial dims only (point order
    # (h, w) matches torch's permute+reshape), no big-operand transposes.
    pcd_cf = jnp.concatenate([p.reshape(b, 3, -1) for p in pcd], axis=2)
    rgb = [rp[0] for rp in rgb_pcd]
    feat_size = rgb[0].shape[1]
    feat_cf = jnp.concatenate([r.reshape(b, feat_size, -1) for r in rgb], axis=2)

    # kernel already emits (B, C, D, H, W): the torch permute(0,4,1,2,3) is free
    voxel_grid, _ = coords_to_bounding_voxel_grid(
        pcd_cf, feat_cf, bounds, point_tile=point_tile)

    rendering_loss_dict = {}
    split_pred = None
    return split_pred, voxel_grid, rendering_loss_dict


# ---------------------------------------------------------------------------
# Pure-JAX reference (scatter via .at[].add) for correctness checking
# ---------------------------------------------------------------------------
def _reference_forward(rgb_pcd, pcd, bounds):
    b = rgb_pcd[0][0].shape[0]
    coords = jnp.concatenate(
        [jnp.transpose(p, (0, 2, 3, 1)).reshape(b, -1, 3) for p in pcd], axis=1)
    F = rgb_pcd[0][0].shape[1]
    feats = jnp.concatenate(
        [jnp.transpose(rp[0], (0, 2, 3, 1)).reshape(b, -1, F) for rp in rgb_pcd],
        axis=1)
    B, N, _ = coords.shape
    C = 3 + F + 1

    mins = bounds[:, :3]
    maxs = bounds[:, 3:6]
    res = (maxs - mins) / (jnp.float32(VOXEL_SIZE) + TINY)
    inv_denom = 1.0 / (res + MIN_DENOMINATOR)   # same hoisted reciprocal as kernel
    shifted = mins - res
    idx = jnp.floor((coords - shifted[:, None, :]) * inv_denom[:, None, :])
    idx = jnp.clip(idx, 0.0, float(W_PAD - 1)).astype(jnp.int32)
    flat = idx[..., 0] * W_PAD * W_PAD + idx[..., 1] * W_PAD + idx[..., 2]
    vals = jnp.concatenate([coords, feats, jnp.ones((B, N, 1), jnp.float32)], -1)

    grids = []
    for bi in range(B):
        g = jnp.zeros((V_FLAT, C), jnp.float32).at[flat[bi]].add(vals[bi])
        g = g / jnp.maximum(g[:, -1:], 1.0)
        grids.append(g)
    grid = jnp.stack(grids).reshape(B, W_PAD, W_PAD, W_PAD, C)
    vox = grid[:, 1:-1, 1:-1, 1:-1]
    occupied = (vox[..., -1:] > 0).astype(jnp.float32)
    ar = jnp.arange(VOXEL_SIZE, dtype=jnp.float32)
    ig = jnp.stack(jnp.meshgrid(ar, ar, ar, indexing="ij"), -1) / float(VOXEL_SIZE)
    ig = jnp.broadcast_to(ig[None], (B,) + ig.shape)
    vg = jnp.concatenate([vox[..., :-1], ig, occupied], -1)
    return jnp.transpose(vg, (0, 4, 1, 2, 3))


if __name__ == "__main__":
    key = jax.random.PRNGKey(0)
    B, F, H, Wimg = 2, 3, 16, 15          # N = 2 cams * 16*15 = 480 points
    n_cams = 2

    keys = jax.random.split(key, 2 * n_cams)
    rgb_pcd = []
    pcd = []
    for c in range(n_cams):
        rgb_c = jax.random.uniform(keys[2 * c], (B, F, H, Wimg), jnp.float32)
        pcd_c = jax.random.uniform(
            keys[2 * c + 1], (B, 3, H, Wimg), jnp.float32,
            minval=-0.55, maxval=0.55)
        rgb_pcd.append((rgb_c, pcd_c))
        pcd.append(pcd_c)
    bounds = jnp.tile(
        jnp.array([[-0.5, -0.5, -0.5, 0.5, 0.5, 0.5]], jnp.float32), (B, 1))

    ref = jax.block_until_ready(_reference_forward(rgb_pcd, pcd, bounds))

    # default per-generation point tile (single tile at this N, padded points)
    split_pred, voxel_grid, loss_dict = qfunction_forward(rgb_pcd, pcd, bounds)
    voxel_grid = jax.block_until_ready(voxel_grid)
    assert split_pred is None and loss_dict == {}
    assert voxel_grid.shape == (B, 3 + F + 3 + 1,
                                VOXEL_SIZE, VOXEL_SIZE, VOXEL_SIZE)
    np.testing.assert_allclose(np.asarray(voxel_grid), np.asarray(ref),
                               rtol=1e-5, atol=1e-5)

    # forced small tile: exercises multi-tile accumulation + init/finalize path
    _, voxel_grid_tiled, _ = qfunction_forward(rgb_pcd, pcd, bounds,
                                               point_tile=128)
    voxel_grid_tiled = jax.block_until_ready(voxel_grid_tiled)
    np.testing.assert_allclose(np.asarray(voxel_grid_tiled), np.asarray(ref),
                               rtol=1e-5, atol=1e-5)

    print("KERNEL_OK")
</pallas_src>

<mosaic_0001>
module attributes {stable_mosaic.version = 11 : i64} {
  func.func @_voxel_scatter_kernel(%arg0: i32, %arg1: i32, %arg2: memref<1x8x512xf32, #tpu.memory_space<vmem>>, %arg3: memref<1x512x1xi32, #tpu.memory_space<vmem>>, %arg4: memref<1x8x1024xf32, #tpu.memory_space<vmem>>) attributes {dimension_semantics = [#tpu.dimension_semantics<parallel>, #tpu.dimension_semantics<arbitrary>], iteration_bounds = array<i64: 2, 1>, scalar_prefetch = 0 : i64, scratch_operands = 0 : i64, tpu.core_type = #tpu.core_type<tc>, window_params = [{transform_indices = @transform_0, window_bounds = array<i64: 1, 8, 512>}, {transform_indices = @transform_1, window_bounds = array<i64: 1, 512, 1>}, {transform_indices = @transform_2, window_bounds = array<i64: 1, 8, 1024>}]} {
    %c0_i32 = arith.constant 0 : i32
    %0 = arith.cmpi eq, %arg1, %c0_i32 : i32
    %1 = arith.extui %0 : i1 to i32
    %c0_i32_0 = arith.constant 0 : i32
    %2 = arith.cmpi ne, %1, %c0_i32_0 : i32
    scf.if %2 {
      %cst_16 = arith.constant 0.000000e+00 : f32
      %23 = vector.broadcast %cst_16 : f32 to vector<1x8x1024xf32>
      %c0_17 = arith.constant 0 : index
      %c0_18 = arith.constant 0 : index
      %c0_19 = arith.constant 0 : index
      %24 = vector.load %arg4[%c0_17, %c0_18, %c0_19] : memref<1x8x1024xf32, #tpu.memory_space<vmem>>, vector<1x8x1024xf32>
      tpu.vector_store %arg4[%c0_17, %c0_18, %c0_19], %23 {strides = array<i32>} : memref<1x8x1024xf32, #tpu.memory_space<vmem>>, vector<1x8x1024xf32>,
    } else {
    }
    %c0 = arith.constant 0 : index
    %c0_1 = arith.constant 0 : index
    %c0_2 = arith.constant 0 : index
    %3 = vector.load %arg2[%c0, %c0_1, %c0_2] : memref<1x8x512xf32, #tpu.memory_space<vmem>>, vector<1x8x512xf32>
    %4 = vector.shape_cast %3 : vector<1x8x512xf32> to vector<8x512xf32>
    %c0_3 = arith.constant 0 : index
    %c0_4 = arith.constant 0 : index
    %c0_5 = arith.constant 0 : index
    %5 = vector.load %arg3[%c0_3, %c0_4, %c0_5] : memref<1x512x1xi32, #tpu.memory_space<vmem>>, vector<1x512x1xi32>
    %6 = vector.shape_cast %5 : vector<1x512x1xi32> to vector<512x1xi32>
    %7 = tpu.iota {dimensions = array<i32: 1>} : vector<512x1024xi32>
    %8 = vector.broadcast %6 : vector<512x1xi32> to vector<512x1024xi32>
    %9 = arith.cmpi eq, %7, %8 : vector<512x1024xi32>
    %cst = arith.constant 1.000000e+00 : f32
    %cst_6 = arith.constant 0.000000e+00 : f32
    %10 = vector.broadcast %cst : f32 to vector<512x1024xf32>
    %11 = vector.broadcast %cst_6 : f32 to vector<512x1024xf32>
    %12 = arith.select %9, %10, %11 : vector<512x1024xi1>, vector<512x1024xf32>
    %cst_7 = arith.constant dense<0.000000e+00> : vector<8x1024xf32>
    %13 = tpu.matmul %4, %12, %cst_7 {dimension_numbers = #tpu.dot_dimension_numbers<[1], [0], [0], [1], [0, 0, 1, 1], [], []>} : vector<8x512xf32>, vector<512x1024xf32>, vector<8x1024xf32> -> vector<8x1024xf32>
    %c0_8 = arith.constant 0 : index
    %c0_9 = arith.constant 0 : index
    %c0_10 = arith.constant 0 : index
    %14 = vector.load %arg4[%c0_8, %c0_9, %c0_10] : memref<1x8x1024xf32, #tpu.memory_space<vmem>>, vector<1x8x1024xf32>
    %15 = vector.shape_cast %14 : vector<1x8x1024xf32> to vector<8x1024xf32>
    %16 = arith.addf %15, %13 : vector<8x1024xf32>
    %c0_11 = arith.constant 0 : index
    %c0_12 = arith.constant 0 : index
    %c0_13 = arith.constant 0 : index
    %17 = vector.load %arg4[%c0_11, %c0_12, %c0_13] : memref<1x8x1024xf32, #tpu.memory_space<vmem>>, vector<1x8x1024xf32>
    %18 = vector.shape_cast %17 : vector<1x8x1024xf32> to vector<8x1024xf32>
    %19 = vector.shape_cast %16 : vector<8x1024xf32> to vector<1x8x1024xf32>
    tpu.vector_store %arg4[%c0_11, %c0_12, %c0_13], %19 {strides = array<i32>} : memref<1x8x1024xf32, #tpu.memory_space<vmem>>, vector<1x8x1024xf32>,
    %c0_i32_14 = arith.constant 0 : i32
    %20 = arith.cmpi eq, %arg1, %c0_i32_14 : i32
    %21 = arith.extui %20 : i1 to i32
    %c0_i32_15 = arith.constant 0 : i32
    %22 = arith.cmpi ne, %21, %c0_i32_15 : i32
    scf.if %22 {
      %c0_16 = arith.constant 0 : index
      %c0_17 = arith.constant 0 : index
      %c0_18 = arith.constant 0 : index
      %23 = vector.load %arg4[%c0_16, %c0_17, %c0_18] : memref<1x8x1024xf32, #tpu.memory_space<vmem>>, vector<1x8x1024xf32>
      %24 = vector.shape_cast %23 : vector<1x8x1024xf32> to vector<8x1024xf32>
      %25 = vector.extract_strided_slice %24 {offsets = [6, 0], sizes = [1, 1024], strides = [1, 1]} : vector<8x1024xf32> to vector<1x1024xf32>
      %cst_19 = arith.constant 1.000000e+00 : f32
      %26 = vector.broadcast %cst_19 : f32 to vector<1x1024xf32>
      %27 = arith.maximumf %25, %26 : vector<1x1024xf32>
      %cst_20 = arith.constant 1.000000e+00 : f32
      %28 = vector.broadcast %cst_20 : f32 to vector<1x1024xf32>
      %29 = arith.divf %28, %27 : vector<1x1024xf32>
      %30 = vector.broadcast %29 : vector<1x1024xf32> to vector<8x1024xf32>
      %31 = arith.mulf %24, %30 : vector<8x1024xf32>
      %c0_21 = arith.constant 0 : index
      %c0_22 = arith.constant 0 : index
      %c0_23 = arith.constant 0 : index
      %32 = vector.load %arg4[%c0_21, %c0_22, %c0_23] : memref<1x8x1024xf32, #tpu.memory_space<vmem>>, vector<1x8x1024xf32>
      %33 = vector.shape_cast %32 : vector<1x8x1024xf32> to vector<8x1024xf32>
      %34 = vector.shape_cast %31 : vector<8x1024xf32> to vector<1x8x1024xf32>
      tpu.vector_store %arg4[%c0_21, %c0_22, %c0_23], %34 {strides = array<i32>} : memref<1x8x1024xf32, #tpu.memory_space<vmem>>, vector<1x8x1024xf32>,
    } else {
    }
    return
  }
  func.func @transform_0(%arg0: i32, %arg1: i32) -> (i32, i32, i32) {
    %c0_i32 = arith.constant 0 : i32
    %c0_i32_0 = arith.constant 0 : i32
    return %arg0, %c0_i32, %arg1 : i32, i32, i32
  }
  func.func @transform_1(%arg0: i32, %arg1: i32) -> (i32, i32, i32) {
    %c0_i32 = arith.constant 0 : i32
    %c0_i32_0 = arith.constant 0 : i32
    return %arg0, %arg1, %c0_i32 : i32, i32, i32
  }
  func.func @transform_2(%arg0: i32, %arg1: i32) -> (i32, i32, i32) {
    %c0_i32 = arith.constant 0 : i32
    %c0_i32_0 = arith.constant 0 : i32
    %c0_i32_1 = arith.constant 0 : i32
    return %arg0, %c0_i32, %c0_i32_0 : i32, i32, i32
  }
}

</mosaic_0001>

<llo_original>
// kernel: tpu_custom_call.1
$region0: #{tpu_custom_call.1}
  #allocation0 [shape = 'u32[]', space=smem, size = 0x4, offset = 0x4, fixed_abs, tag = 'smem constant byte address 0x4 - core index']
  #allocation1 [shape = 'u32[144,128]{1,0:T(1,128)}', space=vmem, size = 0x12000, scoped, tag = 'internal scratch']
  %s0 = inlined_call_operand.vmem [shape: f32[2,8,512], index: 0, kind: input, shape index: {}]
  %s1 = inlined_call_operand.vmem [shape: s32[2,512,1], index: 1, kind: input, shape index: {}]
  %s2 = inlined_call_operand.hbm [shape: f32[2,8,1024], index: 2, kind: output, shape index: {}]
  %s3 = sld [smem:[#allocation0]]
  $region49: #{tpu_custom_call.1} parent=0
    _
  %s5 = ssub.s32 1, %s3
  %s6 = scalar_select 0, %s5, %s3
  $region1: #{tpu_custom_call.1} parent=0
    #allocation2 [shape = 'u8[65536]{0}', space=vmem, size = 0x10000, scoped, tag = 'output window, operand 0']
    #allocation3 [shape = 's32[2]{0}', space=sflag, size = 0x8, scoped, tag = 'scoped memory for tpu_custom_call.1']
    %7 = vsyncpa [#allocation3], 0
    %s8 = scalar_lea.sflag [#allocation3], 1
    %9 = vsyncpa %s8, 0
    loop: start=0, step=1, limit=4
    $region2: #{tpu_custom_call.1} parent=1 // loop_pre_header
      _
    $region3: #{tpu_custom_call.1} parent=1 // loop_header
      %s11 = sphi 0, %s15
      %p12 = scmp.ge.s32.totalorder %s11, 4
      %s18 = sphi 0, %s30
      %s19 = sphi 0, %s26
      %s20 = sphi 0, %s18
      %s21 = sphi 0, %s19
      %s22 = sphi 0, %s20
      %s23 = sphi 0, %s21
      %s35 = sphi 0, %s37
      %s38 = sphi 0, %s35
      %s39 = sphi 0, %s38
      %s55 = sphi 0, %s39
      %s63 = sphi 0, %s65
      %s66 = sphi 0, %s63
      %s67 = sphi 0, %s66
      %s83 = sphi 0, %s67
      %s89 = sphi 0, %s91
      %s92 = sphi 0, %s89
      %s93 = sphi 0, %s92
      %s109 = sphi 0, %s93
    $region4: #{tpu_custom_call.1} parent=1 // loop_header_branch
      %14 = sbr.rel (%p12) target = $region8
    $region5: #{tpu_custom_call.1} parent=1 // loop_body
      %s16 = ssub.s32 %s11, 1
      %s17 = ssub.s32 %s11, 2
      %s24 = sadd.s32 1, %s19
      %p25 = scmp.ge.s32.totalorder %s24, 1
      %s26 = scalar_select %p25, 0, %s24
      %s27 = sadd.s32 1, %s18
      %s28 = scalar_select %p25, %s27, %s18
      %p29 = scmp.ge.s32.totalorder %s28, 2
      %s30 = scalar_select %p29, 0, %s28
      %s31 = ssub.s32 %s18, %s30
      %s32 = ssub.s32 %s19, %s26
      %s33 = sor.u32 %s31, %s32
      %p34 = scmp.eq.s32.totalorder %s33, 0
      %s36 = sadd.s32 %s35, 1
      %s37 = scalar_select %p34, %s35, %s36
      %p40 = pneg %p34
      %p41 = scmp.eq.s32.totalorder %s11, 1
      %p42 = por %p40, %p41
      %p43 = scmp.ne.s32.totalorder %s35, %s38
      %p44 = scmp.eq.s32.totalorder %s11, 0
      %p45 = por %p43, %p44
      %p46 = scmp.ne.s32.totalorder %s35, %s38
      %p47 = scmp.eq.s32.totalorder %s16, 1
      %p48 = por %p46, %p47
      %p49 = scmp.ne.s32.totalorder %s38, %s39
      %p50 = scmp.eq.s32.totalorder %s16, 0
      %p51 = por %p49, %p50
      %p52 = scmp.ne.s32.totalorder %s38, %s39
      %p53 = scmp.eq.s32.totalorder %s17, 1
      %p54 = por %p52, %p53
      %p56 = scmp.ne.s32.totalorder %s39, %s55
      %p57 = scmp.eq.s32.totalorder %s17, 0
      %p58 = por %p56, %p57
      %s59 = ssub.s32 %s18, %s30
      %s60 = ssub.s32 %s19, %s26
      %s61 = sor.u32 %s59, %s60
      %p62 = scmp.eq.s32.totalorder %s61, 0
      %s64 = sadd.s32 %s63, 1
      %s65 = scalar_select %p62, %s63, %s64
      %p68 = pneg %p62
      %p69 = scmp.eq.s32.totalorder %s11, 1
      %p70 = por %p68, %p69
      %p71 = scmp.ne.s32.totalorder %s63, %s66
      %p72 = scmp.eq.s32.totalorder %s11, 0
      %p73 = por %p71, %p72
      %p74 = scmp.ne.s32.totalorder %s63, %s66
      %p75 = scmp.eq.s32.totalorder %s16, 1
      %p76 = por %p74, %p75
      %p77 = scmp.ne.s32.totalorder %s66, %s67
      %p78 = scmp.eq.s32.totalorder %s16, 0
      %p79 = por %p77, %p78
      %p80 = scmp.ne.s32.totalorder %s66, %s67
      %p81 = scmp.eq.s32.totalorder %s17, 1
      %p82 = por %p80, %p81
      %p84 = scmp.ne.s32.totalorder %s67, %s83
      %p85 = scmp.eq.s32.totalorder %s17, 0
      %p86 = por %p84, %p85
      %s87 = ssub.s32 %s18, %s30
      %p88 = scmp.eq.s32.totalorder %s87, 0
      %s90 = sadd.s32 %s89, 1
      %s91 = scalar_select %p88, %s89, %s90
      %p94 = pneg %p88
      %p95 = scmp.eq.s32.totalorder %s11, 1
      %p96 = por %p94, %p95
      %p97 = scmp.ne.s32.totalorder %s89, %s92
      %p98 = scmp.eq.s32.totalorder %s11, 0
      %p99 = por %p97, %p98
      %p100 = scmp.ne.s32.totalorder %s89, %s92
      %p101 = scmp.eq.s32.totalorder %s16, 1
      %p102 = por %p100, %p101
      %p103 = scmp.ne.s32.totalorder %s92, %s93
      %p104 = scmp.eq.s32.totalorder %s16, 0
      %p105 = por %p103, %p104
      %p106 = scmp.ne.s32.totalorder %s92, %s93
      %p107 = scmp.eq.s32.totalorder %s17, 1
      %p108 = por %p106, %p107
      %p110 = scmp.ne.s32.totalorder %s93, %s109
      %p111 = scmp.eq.s32.totalorder %s17, 0
      %p112 = por %p110, %p111
      %p113 = scmp.le.s32.totalorder 1, %s11
      %p114 = scmp.lt.s32.totalorder %s11, 3
      %p115 = pnand %p113, %p114
      %p116 = pneg %p115
      // Predicated region
      $region9: #{tpu_custom_call.1} parent=5 // pred_check
        _
      $region10: #{tpu_custom_call.1} parent=5 // pred_check_branch
        %118 = sbr.rel (%p115) target = $region12
      $region11: #{tpu_custom_call.1} parent=5 // pred_region
        %s119 = ssub.s32 %s11, 1
      $region12: #{tpu_custom_call.1} parent=5 // pred_fallthru
        _
      %p120 = scmp.lt.s32.totalorder %s11, 2
      // Predicated region
      $region13: #{tpu_custom_call.1} parent=5 // pred_check
        %p121 = pneg %p120
      $region14: #{tpu_custom_call.1} parent=5 // pred_check_branch
        %123 = sbr.rel (%p121) target = $region16
      $region15: #{tpu_custom_call.1} parent=5 // pred_region
        // Predicated region
        $region17: #{tpu_custom_call.1} parent=15 // pred_check
          %p124 = pneg %p45
        $region18: #{tpu_custom_call.1} parent=15 // pred_check_branch
          %126 = sbr.rel (%p124) target = $region20
        $region19: #{tpu_custom_call.1} parent=15 // pred_region
          %s127 = smul.u32 4, %s19
          %p128 = scmp.lt.s32.totalorder %s18, 1
          %s129 = scalar_select %p128, %s18, 1
          %p130 = scmp.lt.s32.totalorder %s127, 3
          %s131 = scalar_select %p130, %s127, 3
          %s132 = smul.addr %s129, 4
          %s133 = sadd.s32 %s131, %s132
          %s134 = smul.addr %s133, 8
          %s135 = scalar_lea.vmem %s0, %s134
          %s136 = smul.u32 4, %s19
        $region20: #{tpu_custom_call.1} parent=15 // pred_fallthru
          _
        // Predicated region
        $region21: #{tpu_custom_call.1} parent=15 // pred_check
          %p137 = pneg %p73
        $region22: #{tpu_custom_call.1} parent=15 // pred_check_branch
          %139 = sbr.rel (%p137) target = $region24
        $region23: #{tpu_custom_call.1} parent=15 // pred_region
          %s140 = smul.u32 64, %s19
          %p141 = scmp.lt.s32.totalorder %s18, 1
          %s142 = scalar_select %p141, %s18, 1
          %p143 = scmp.lt.s32.totalorder %s140, 63
          %s144 = scalar_select %p143, %s140, 63
          %s145 = smul.addr %s142, 64
          %s146 = sadd.s32 %s144, %s145
          %s147 = smul.addr %s146, 8
          %s148 = scalar_lea.vmem %s1, %s147
          %s149 = smul.u32 64, %s19
        $region24: #{tpu_custom_call.1} parent=15 // pred_fallthru
          _
      $region16: #{tpu_custom_call.1} parent=5 // pred_fallthru
        _
      %p150 = scmp.le.s32.totalorder 1, %s11
      %p151 = scmp.lt.s32.totalorder %s11, 3
      %p152 = pnand %p150, %p151
      %p153 = pneg %p152
      // Predicated region
      $region25: #{tpu_custom_call.1} parent=5 // pred_check
        _
      $region26: #{tpu_custom_call.1} parent=5 // pred_check_branch
        %155 = sbr.rel (%p152) target = $region28
      $region27: #{tpu_custom_call.1} parent=5 // pred_region
        %s156 = ssub.s32 %s11, 1
        %s157 = smul.u32 4, %s21
        %p158 = scmp.lt.s32.totalorder %s20, 1
        %s159 = scalar_select %p158, %s20, 1
        %p160 = scmp.lt.s32.totalorder %s157, 3
        %s161 = scalar_select %p160, %s157, 3
        %s162 = smul.addr %s159, 4
        %s163 = sadd.s32 %s161, %s162
        %s164 = smul.addr %s163, 8
        %s165 = scalar_lea.vmem %s0, %s164
        %p166 = pneg %p51
        %p167 = pneg %p48
        %s168 = smul.u32 64, %s21
        %p169 = scmp.lt.s32.totalorder %s20, 1
        %s170 = scalar_select %p169, %s20, 1
        %p171 = scmp.lt.s32.totalorder %s168, 63
        %s172 = scalar_select %p171, %s168, 63
        %s173 = smul.addr %s170, 64
        %s174 = sadd.s32 %s172, %s173
        %s175 = smul.addr %s174, 8
        %s176 = scalar_lea.vmem %s1, %s175
        %p177 = pneg %p79
        %p178 = pneg %p76
        %p179 = pneg %p105
        %p180 = pneg %p102
        %s181 = sand.u32 %s92, 1
        %s182 = scalar_lea.sflag [#allocation3], %s181
        %s183 = sand.u32 %s92, 1
        %s184 = smul.addr %s183, 64
        %s185 = scalar_lea.vmem [#allocation2], %s184
        %s186 = smul.u32 4, %s21
        %p187 = scmp.lt.s32.totalorder %s20, 1
        %s188 = scalar_select %p187, %s20, 1
        %p189 = scmp.lt.s32.totalorder %s186, 3
        %s190 = scalar_select %p189, %s186, 3
        %s191 = smul.addr %s188, 4
        %s192 = sadd.s32 %s190, %s191
        %s193 = smul.addr %s192, 8
        %s194 = scalar_lea.vmem %s0, %s193
        %s195 = smul.u32 4, %s21
        %s196 = smul.u32 64, %s21
        %p197 = scmp.lt.s32.totalorder %s20, 1
        %s198 = scalar_select %p197, %s20, 1
        %p199 = scmp.lt.s32.totalorder %s196, 63
        %s200 = scalar_select %p199, %s196, 63
        %s201 = smul.addr %s198, 64
        %s202 = sadd.s32 %s200, %s201
        %s203 = smul.addr %s202, 8
        %s204 = scalar_lea.vmem %s1, %s203
        %s205 = smul.u32 64, %s21
        %p206 = scmp.eq.s32.totalorder %s21, 0
        // Predicated region
        $region29: #{tpu_custom_call.1} parent=27 // pred_check
          %p207 = pneg %p206
        $region30: #{tpu_custom_call.1} parent=27 // pred_check_branch
          %209 = sbr.rel (%p207) target = $region32
        $region31: #{tpu_custom_call.1} parent=27 // pred_region
          %210 = vst [vmem:[%s185] sm:$0xff] 0.0
          %211 = vst [vmem:[%s185 + $0x8] sm:$0xff] 0.0
          %212 = vst [vmem:[%s185 + $0x10] sm:$0xff] 0.0
          %213 = vst [vmem:[%s185 + $0x18] sm:$0xff] 0.0
          %214 = vst [vmem:[%s185 + $0x20] sm:$0xff] 0.0
          %215 = vst [vmem:[%s185 + $0x28] sm:$0xff] 0.0
          %216 = vst [vmem:[%s185 + $0x30] sm:$0xff] 0.0
          %217 = vst [vmem:[%s185 + $0x38] sm:$0xff] 0.0
        $region32: #{tpu_custom_call.1} parent=27 // pred_fallthru
          _
        %v218 = vld [vmem:[%s194] sm:$0xff]
        %v219 = vld [vmem:[%s194 + $0x8] sm:$0xff]
        %v220 = vld [vmem:[%s194 + $0x10] sm:$0xff]
        %v221 = vld [vmem:[%s194 + $0x18] sm:$0xff]
        %v222 = vld [vmem:[%s204] sm:$0xff]
        %v223 = vld [vmem:[%s204 + $0x8] sm:$0xff]
        %v224 = vld [vmem:[%s204 + $0x10] sm:$0xff]
        %v225 = vld [vmem:[%s204 + $0x18] sm:$0xff]
        %v226 = vld [vmem:[%s204 + $0x20] sm:$0xff]
        %v227 = vld [vmem:[%s204 + $0x28] sm:$0xff]
        %v228 = vld [vmem:[%s204 + $0x30] sm:$0xff]
        %v229 = vld [vmem:[%s204 + $0x38] sm:$0xff]
        %v230 = vld [vmem:[%s204 + $0x40] sm:$0xff]
        %v231 = vld [vmem:[%s204 + $0x48] sm:$0xff]
        %v232 = vld [vmem:[%s204 + $0x50] sm:$0xff]
        %v233 = vld [vmem:[%s204 + $0x58] sm:$0xff]
        %v234 = vld [vmem:[%s204 + $0x60] sm:$0xff]
        %v235 = vld [vmem:[%s204 + $0x68] sm:$0xff]
        %v236 = vld [vmem:[%s204 + $0x70] sm:$0xff]
        %v237 = vld [vmem:[%s204 + $0x78] sm:$0xff]
        %v238 = vld [vmem:[%s204 + $0x80] sm:$0xff]
        %v239 = vld [vmem:[%s204 + $0x88] sm:$0xff]
        %v240 = vld [vmem:[%s204 + $0x90] sm:$0xff]
        %v241 = vld [vmem:[%s204 + $0x98] sm:$0xff]
        %v242 = vld [vmem:[%s204 + $0xa0] sm:$0xff]
        %v243 = vld [vmem:[%s204 + $0xa8] sm:$0xff]
        %v244 = vld [vmem:[%s204 + $0xb0] sm:$0xff]
        %v245 = vld [vmem:[%s204 + $0xb8] sm:$0xff]
        %v246 = vld [vmem:[%s204 + $0xc0] sm:$0xff]
        %v247 = vld [vmem:[%s204 + $0xc8] sm:$0xff]
        %v248 = vld [vmem:[%s204 + $0xd0] sm:$0xff]
        %v249 = vld [vmem:[%s204 + $0xd8] sm:$0xff]
        %v250 = vld [vmem:[%s204 + $0xe0] sm:$0xff]
        %v251 = vld [vmem:[%s204 + $0xe8] sm:$0xff]
        %v252 = vld [vmem:[%s204 + $0xf0] sm:$0xff]
        %v253 = vld [vmem:[%s204 + $0xf8] sm:$0xff]
        %v254 = vld [vmem:[%s204 + $0x100] sm:$0xff]
        %v255 = vld [vmem:[%s204 + $0x108] sm:$0xff]
        %v256 = vld [vmem:[%s204 + $0x110] sm:$0xff]
        %v257 = vld [vmem:[%s204 + $0x118] sm:$0xff]
        %v258 = vld [vmem:[%s204 + $0x120] sm:$0xff]
        %v259 = vld [vmem:[%s204 + $0x128] sm:$0xff]
        %v260 = vld [vmem:[%s204 + $0x130] sm:$0xff]
        %v261 = vld [vmem:[%s204 + $0x138] sm:$0xff]
        %v262 = vld [vmem:[%s204 + $0x140] sm:$0xff]
        %v263 = vld [vmem:[%s204 + $0x148] sm:$0xff]
        %v264 = vld [vmem:[%s204 + $0x150] sm:$0xff]
        %v265 = vld [vmem:[%s204 + $0x158] sm:$0xff]
        %v266 = vld [vmem:[%s204 + $0x160] sm:$0xff]
        %v267 = vld [vmem:[%s204 + $0x168] sm:$0xff]
        %v268 = vld [vmem:[%s204 + $0x170] sm:$0xff]
        %v269 = vld [vmem:[%s204 + $0x178] sm:$0xff]
        %v270 = vld [vmem:[%s204 + $0x180] sm:$0xff]
        %v271 = vld [vmem:[%s204 + $0x188] sm:$0xff]
        %v272 = vld [vmem:[%s204 + $0x190] sm:$0xff]
        %v273 = vld [vmem:[%s204 + $0x198] sm:$0xff]
        %v274 = vld [vmem:[%s204 + $0x1a0] sm:$0xff]
        %v275 = vld [vmem:[%s204 + $0x1a8] sm:$0xff]
        %v276 = vld [vmem:[%s204 + $0x1b0] sm:$0xff]
        %v277 = vld [vmem:[%s204 + $0x1b8] sm:$0xff]
        %v278 = vld [vmem:[%s204 + $0x1c0] sm:$0xff]
        %v279 = vld [vmem:[%s204 + $0x1c8] sm:$0xff]
        %v280 = vld [vmem:[%s204 + $0x1d0] sm:$0xff]
        %v281 = vld [vmem:[%s204 + $0x1d8] sm:$0xff]
        %v282 = vld [vmem:[%s204 + $0x1e0] sm:$0xff]
        %v283 = vld [vmem:[%s204 + $0x1e8] sm:$0xff]
        %v284 = vld [vmem:[%s204 + $0x1f0] sm:$0xff]
        %v285 = vld [vmem:[%s204 + $0x1f8] sm:$0xff]
        %v286 = vlaneseq
        %v287 = vand.u32 %v286, 127
        %v288 = vadd.s32 %v287, 128
        %v289 = vadd.s32 %v287, 256
        %v290 = vadd.s32 %v287, 384
        %v291 = vadd.s32 %v287, 512
        %v292 = vadd.s32 %v287, 640
        %v293 = vadd.s32 %v287, 768
        %v294 = vadd.s32 %v287, 896
        %295 = vset.pattern.permute.xlu0 0
        %296 = vperm.xlu0 %295, %v222
        %v297 = vpop.permute.xlu0 %296
        %298 = vset.pattern.permute.xlu0 0
        %299 = vperm.xlu0 %298, %v223
        %v300 = vpop.permute.xlu0 %299
        %301 = vset.pattern.permute.xlu0 0
        %302 = vperm.xlu0 %301, %v224
        %v303 = vpop.permute.xlu0 %302
        %304 = vset.pattern.permute.xlu0 0
        %305 = vperm.xlu0 %304, %v225
        %v306 = vpop.permute.xlu0 %305
        %307 = vset.pattern.permute.xlu0 0
        %308 = vperm.xlu0 %307, %v226
        %v309 = vpop.permute.xlu0 %308
        %310 = vset.pattern.permute.xlu0 0
        %311 = vperm.xlu0 %310, %v227
        %v312 = vpop.permute.xlu0 %311
        %313 = vset.pattern.permute.xlu0 0
        %314 = vperm.xlu0 %313, %v228
        %v315 = vpop.permute.xlu0 %314
        %316 = vset.pattern.permute.xlu0 0
        %317 = vperm.xlu0 %316, %v229
        %v318 = vpop.permute.xlu0 %317
        %319 = vset.pattern.permute.xlu0 0
        %320 = vperm.xlu0 %319, %v230
        %v321 = vpop.permute.xlu0 %320
        %322 = vset.pattern.permute.xlu0 0
        %323 = vperm.xlu0 %322, %v231
        %v324 = vpop.permute.xlu0 %323
        %325 = vset.pattern.permute.xlu0 0
        %326 = vperm.xlu0 %325, %v232
        %v327 = vpop.permute.xlu0 %326
        %328 = vset.pattern.permute.xlu0 0
        %329 = vperm.xlu0 %328, %v233
        %v330 = vpop.permute.xlu0 %329
        %331 = vset.pattern.permute.xlu0 0
        %332 = vperm.xlu0 %331, %v234
        %v333 = vpop.permute.xlu0 %332
        %334 = vset.pattern.permute.xlu0 0
        %335 = vperm.xlu0 %334, %v235
        %v336 = vpop.permute.xlu0 %335
        %337 = vset.pattern.permute.xlu0 0
        %338 = vperm.xlu0 %337, %v236
        %v339 = vpop.permute.xlu0 %338
        %340 = vset.pattern.permute.xlu0 0
        %341 = vperm.xlu0 %340, %v237
        %v342 = vpop.permute.xlu0 %341
        %343 = vset.pattern.permute.xlu0 0
        %344 = vperm.xlu0 %343, %v238
        %v345 = vpop.permute.xlu0 %344
        %346 = vset.pattern.permute.xlu0 0
        %347 = vperm.xlu0 %346, %v239
        %v348 = vpop.permute.xlu0 %347
        %349 = vset.pattern.permute.xlu0 0
        %350 = vperm.xlu0 %349, %v240
        %v351 = vpop.permute.xlu0 %350
        %352 = vset.pattern.permute.xlu0 0
        %353 = vperm.xlu0 %352, %v241
        %v354 = vpop.permute.xlu0 %353
        %355 = vset.pattern.permute.xlu0 0
        %356 = vperm.xlu0 %355, %v242
        %v357 = vpop.permute.xlu0 %356
        %358 = vset.pattern.permute.xlu0 0
        %359 = vperm.xlu0 %358, %v243
        %v360 = vpop.permute.xlu0 %359
        %361 = vset.pattern.permute.xlu0 0
        %362 = vperm.xlu0 %361, %v244
        %v363 = vpop.permute.xlu0 %362
        %364 = vset.pattern.permute.xlu0 0
        %365 = vperm.xlu0 %364, %v245
        %v366 = vpop.permute.xlu0 %365
        %367 = vset.pattern.permute.xlu0 0
        %368 = vperm.xlu0 %367, %v246
        %v369 = vpop.permute.xlu0 %368
        %370 = vset.pattern.permute.xlu0 0
        %371 = vperm.xlu0 %370, %v247
        %v372 = vpop.permute.xlu0 %371
        %373 = vset.pattern.permute.xlu0 0
        %374 = vperm.xlu0 %373, %v248
        %v375 = vpop.permute.xlu0 %374
        %376 = vset.pattern.permute.xlu0 0
        %377 = vperm.xlu0 %376, %v249
        %v378 = vpop.permute.xlu0 %377
        %379 = vset.pattern.permute.xlu0 0
        %380 = vperm.xlu0 %379, %v250
        %v381 = vpop.permute.xlu0 %380
        %382 = vset.pattern.permute.xlu0 0
        %383 = vperm.xlu0 %382, %v251
        %v384 = vpop.permute.xlu0 %383
        %385 = vset.pattern.permute.xlu0 0
        %386 = vperm.xlu0 %385, %v252
        %v387 = vpop.permute.xlu0 %386
        %388 = vset.pattern.permute.xlu0 0
        %389 = vperm.xlu0 %388, %v253
        %v390 = vpop.permute.xlu0 %389
        %391 = vset.pattern.permute.xlu0 0
        %392 = vperm.xlu0 %391, %v254
        %v393 = vpop.permute.xlu0 %392
        %394 = vset.pattern.permute.xlu0 0
        %395 = vperm.xlu0 %394, %v255
        %v396 = vpop.permute.xlu0 %395
        %397 = vset.pattern.permute.xlu0 0
        %398 = vperm.xlu0 %397, %v256
        %v399 = vpop.permute.xlu0 %398
        %400 = vset.pattern.permute.xlu0 0
        %401 = vperm.xlu0 %400, %v257
        %v402 = vpop.permute.xlu0 %401
        %403 = vset.pattern.permute.xlu0 0
        %404 = vperm.xlu0 %403, %v258
        %v405 = vpop.permute.xlu0 %404
        %406 = vset.pattern.permute.xlu0 0
        %407 = vperm.xlu0 %406, %v259
        %v408 = vpop.permute.xlu0 %407
        %409 = vset.pattern.permute.xlu0 0
        %410 = vperm.xlu0 %409, %v260
        %v411 = vpop.permute.xlu0 %410
        %412 = vset.pattern.permute.xlu0 0
        %413 = vperm.xlu0 %412, %v261
        %v414 = vpop.permute.xlu0 %413
        %415 = vset.pattern.permute.xlu0 0
        %416 = vperm.xlu0 %415, %v262
        %v417 = vpop.permute.xlu0 %416
        %418 = vset.pattern.permute.xlu0 0
        %419 = vperm.xlu0 %418, %v263
        %v420 = vpop.permute.xlu0 %419
        %421 = vset.pattern.permute.xlu0 0
        %422 = vperm.xlu0 %421, %v264
        %v423 = vpop.permute.xlu0 %422
        %424 = vset.pattern.permute.xlu0 0
        %425 = vperm.xlu0 %424, %v265
        %v426 = vpop.permute.xlu0 %425
        %427 = vset.pattern.permute.xlu0 0
        %428 = vperm.xlu0 %427, %v266
        %v429 = vpop.permute.xlu0 %428
        %430 = vset.pattern.permute.xlu0 0
        %431 = vperm.xlu0 %430, %v267
        %v432 = vpop.permute.xlu0 %431
        %433 = vset.pattern.permute.xlu0 0
        %434 = vperm.xlu0 %433, %v268
        %v435 = vpop.permute.xlu0 %434
        %436 = vset.pattern.permute.xlu0 0
        %437 = vperm.xlu0 %436, %v269
        %v438 = vpop.permute.xlu0 %437
        %439 = vset.pattern.permute.xlu0 0
        %440 = vperm.xlu0 %439, %v270
        %v441 = vpop.permute.xlu0 %440
        %442 = vset.pattern.permute.xlu0 0
        %443 = vperm.xlu0 %442, %v271
        %v444 = vpop.permute.xlu0 %443
        %445 = vset.pattern.permute.xlu0 0
        %446 = vperm.xlu0 %445, %v272
        %v447 = vpop.permute.xlu0 %446
        %448 = vset.pattern.permute.xlu0 0
        %449 = vperm.xlu0 %448, %v273
        %v450 = vpop.permute.xlu0 %449
        %451 = vset.pattern.permute.xlu0 0
        %452 = vperm.xlu0 %451, %v274
        %v453 = vpop.permute.xlu0 %452
        %454 = vset.pattern.permute.xlu0 0
        %455 = vperm.xlu0 %454, %v275
        %v456 = vpop.permute.xlu0 %455
        %457 = vset.pattern.permute.xlu0 0
        %458 = vperm.xlu0 %457, %v276
        %v459 = vpop.permute.xlu0 %458
        %460 = vset.pattern.permute.xlu0 0
        %461 = vperm.xlu0 %460, %v277
        %v462 = vpop.permute.xlu0 %461
        %463 = vset.pattern.permute.xlu0 0
        %464 = vperm.xlu0 %463, %v278
        %v465 = vpop.permute.xlu0 %464
        %466 = vset.pattern.permute.xlu0 0
        %467 = vperm.xlu0 %466, %v279
        %v468 = vpop.permute.xlu0 %467
        %469 = vset.pattern.permute.xlu0 0
        %470 = vperm.xlu0 %469, %v280
        %v471 = vpop.permute.xlu0 %470
        %472 = vset.pattern.permute.xlu0 0
        %473 = vperm.xlu0 %472, %v281
        %v474 = vpop.permute.xlu0 %473
        %475 = vset.pattern.permute.xlu0 0
        %476 = vperm.xlu0 %475, %v282
        %v477 = vpop.permute.xlu0 %476
        %478 = vset.pattern.permute.xlu0 0
        %479 = vperm.xlu0 %478, %v283
        %v480 = vpop.permute.xlu0 %479
        %481 = vset.pattern.permute.xlu0 0
        %482 = vperm.xlu0 %481, %v284
        %v483 = vpop.permute.xlu0 %482
        %484 = vset.pattern.permute.xlu0 0
        %485 = vperm.xlu0 %484, %v285
        %v486 = vpop.permute.xlu0 %485
        %vm487 = vcmp.eq.s32.totalorder %v287, %v297
        %vm488 = vcmp.eq.s32.totalorder %v288, %v297
        %vm489 = vcmp.eq.s32.totalorder %v289, %v297
        %vm490 = vcmp.eq.s32.totalorder %v290, %v297
        %vm491 = vcmp.eq.s32.totalorder %v291, %v297
        %vm492 = vcmp.eq.s32.totalorder %v292, %v297
        %vm493 = vcmp.eq.s32.totalorder %v293, %v297
        %vm494 = vcmp.eq.s32.totalorder %v294, %v297
        %vm495 = vcmp.eq.s32.totalorder %v287, %v300
        %vm496 = vcmp.eq.s32.totalorder %v288, %v300
        %vm497 = vcmp.eq.s32.totalorder %v289, %v300
        %vm498 = vcmp.eq.s32.totalorder %v290, %v300
        %vm499 = vcmp.eq.s32.totalorder %v291, %v300
        %vm500 = vcmp.eq.s32.totalorder %v292, %v300
        %vm501 = vcmp.eq.s32.totalorder %v293, %v300
        %vm502 = vcmp.eq.s32.totalorder %v294, %v300
        %vm503 = vcmp.eq.s32.totalorder %v287, %v303
        %vm504 = vcmp.eq.s32.totalorder %v288, %v303
        %vm505 = vcmp.eq.s32.totalorder %v289, %v303
        %vm506 = vcmp.eq.s32.totalorder %v290, %v303
        %vm507 = vcmp.eq.s32.totalorder %v291, %v303
        %vm508 = vcmp.eq.s32.totalorder %v292, %v303
        %vm509 = vcmp.eq.s32.totalorder %v293, %v303
        %vm510 = vcmp.eq.s32.totalorder %v294, %v303
        %vm511 = vcmp.eq.s32.totalorder %v287, %v306
        %vm512 = vcmp.eq.s32.totalorder %v288, %v306
        %vm513 = vcmp.eq.s32.totalorder %v289, %v306
        %vm514 = vcmp.eq.s32.totalorder %v290, %v306
        %vm515 = vcmp.eq.s32.totalorder %v291, %v306
        %vm516 = vcmp.eq.s32.totalorder %v292, %v306
        %vm517 = vcmp.eq.s32.totalorder %v293, %v306
        %vm518 = vcmp.eq.s32.totalorder %v294, %v306
        %vm519 = vcmp.eq.s32.totalorder %v287, %v309
        %vm520 = vcmp.eq.s32.totalorder %v288, %v309
        %vm521 = vcmp.eq.s32.totalorder %v289, %v309
        %vm522 = vcmp.eq.s32.totalorder %v290, %v309
        %vm523 = vcmp.eq.s32.totalorder %v291, %v309
        %vm524 = vcmp.eq.s32.totalorder %v292, %v309
        %vm525 = vcmp.eq.s32.totalorder %v293, %v309
        %vm526 = vcmp.eq.s32.totalorder %v294, %v309
        %vm527 = vcmp.eq.s32.totalorder %v287, %v312
        %vm528 = vcmp.eq.s32.totalorder %v288, %v312
        %vm529 = vcmp.eq.s32.totalorder %v289, %v312
        %vm530 = vcmp.eq.s32.totalorder %v290, %v312
        %vm531 = vcmp.eq.s32.totalorder %v291, %v312
        %vm532 = vcmp.eq.s32.totalorder %v292, %v312
        %vm533 = vcmp.eq.s32.totalorder %v293, %v312
        %vm534 = vcmp.eq.s32.totalorder %v294, %v312
        %vm535 = vcmp.eq.s32.totalorder %v287, %v315
        %vm536 = vcmp.eq.s32.totalorder %v288, %v315
        %vm537 = vcmp.eq.s32.totalorder %v289, %v315
        %vm538 = vcmp.eq.s32.totalorder %v290, %v315
        %vm539 = vcmp.eq.s32.totalorder %v291, %v315
        %vm540 = vcmp.eq.s32.totalorder %v292, %v315
        %vm541 = vcmp.eq.s32.totalorder %v293, %v315
        %vm542 = vcmp.eq.s32.totalorder %v294, %v315
        %vm543 = vcmp.eq.s32.totalorder %v287, %v318
        %vm544 = vcmp.eq.s32.totalorder %v288, %v318
        %vm545 = vcmp.eq.s32.totalorder %v289, %v318
        %vm546 = vcmp.eq.s32.totalorder %v290, %v318
        %vm547 = vcmp.eq.s32.totalorder %v291, %v318
        %vm548 = vcmp.eq.s32.totalorder %v292, %v318
        %vm549 = vcmp.eq.s32.totalorder %v293, %v318
        %vm550 = vcmp.eq.s32.totalorder %v294, %v318
        %vm551 = vcmp.eq.s32.totalorder %v287, %v321
        %vm552 = vcmp.eq.s32.totalorder %v288, %v321
        %vm553 = vcmp.eq.s32.totalorder %v289, %v321
        %vm554 = vcmp.eq.s32.totalorder %v290, %v321
        %vm555 = vcmp.eq.s32.totalorder %v291, %v321
        %vm556 = vcmp.eq.s32.totalorder %v292, %v321
        %vm557 = vcmp.eq.s32.totalorder %v293, %v321
        %vm558 = vcmp.eq.s32.totalorder %v294, %v321
        %vm559 = vcmp.eq.s32.totalorder %v287, %v324
        %vm560 = vcmp.eq.s32.totalorder %v288, %v324
        %vm561 = vcmp.eq.s32.totalorder %v289, %v324
        %vm562 = vcmp.eq.s32.totalorder %v290, %v324
        %vm563 = vcmp.eq.s32.totalorder %v291, %v324
        %vm564 = vcmp.eq.s32.totalorder %v292, %v324
        %vm565 = vcmp.eq.s32.totalorder %v293, %v324
        %vm566 = vcmp.eq.s32.totalorder %v294, %v324
        %vm567 = vcmp.eq.s32.totalorder %v287, %v327
        %vm568 = vcmp.eq.s32.totalorder %v288, %v327
        %vm569 = vcmp.eq.s32.totalorder %v289, %v327
        %vm570 = vcmp.eq.s32.totalorder %v290, %v327
        %vm571 = vcmp.eq.s32.totalorder %v291, %v327
        %vm572 = vcmp.eq.s32.totalorder %v292, %v327
        %vm573 = vcmp.eq.s32.totalorder %v293, %v327
        %vm574 = vcmp.eq.s32.totalorder %v294, %v327
        %vm575 = vcmp.eq.s32.totalorder %v287, %v330
        %vm576 = vcmp.eq.s32.totalorder %v288, %v330
        %vm577 = vcmp.eq.s32.totalorder %v289, %v330
        %vm578 = vcmp.eq.s32.totalorder %v290, %v330
        %vm579 = vcmp.eq.s32.totalorder %v291, %v330
        %vm580 = vcmp.eq.s32.totalorder %v292, %v330
        %vm581 = vcmp.eq.s32.totalorder %v293, %v330
        %vm582 = vcmp.eq.s32.totalorder %v294, %v330
        %vm583 = vcmp.eq.s32.totalorder %v287, %v333
        %vm584 = vcmp.eq.s32.totalorder %v288, %v333
        %vm585 = vcmp.eq.s32.totalorder %v289, %v333
        %vm586 = vcmp.eq.s32.totalorder %v290, %v333
        %vm587 = vcmp.eq.s32.totalorder %v291, %v333
        %vm588 = vcmp.eq.s32.totalorder %v292, %v333
        %vm589 = vcmp.eq.s32.totalorder %v293, %v333
        %vm590 = vcmp.eq.s32.totalorder %v294, %v333
        %vm591 = vcmp.eq.s32.totalorder %v287, %v336
        %vm592 = vcmp.eq.s32.totalorder %v288, %v336
        %vm593 = vcmp.eq.s32.totalorder %v289, %v336
        %vm594 = vcmp.eq.s32.totalorder %v290, %v336
        %vm595 = vcmp.eq.s32.totalorder %v291, %v336
        %vm596 = vcmp.eq.s32.totalorder %v292, %v336
        %vm597 = vcmp.eq.s32.totalorder %v293, %v336
        %vm598 = vcmp.eq.s32.totalorder %v294, %v336
        %vm599 = vcmp.eq.s32.totalorder %v287, %v339
        %vm600 = vcmp.eq.s32.totalorder %v288, %v339
        %vm601 = vcmp.eq.s32.totalorder %v289, %v339
        %vm602 = vcmp.eq.s32.totalorder %v290, %v339
        %vm603 = vcmp.eq.s32.totalorder %v291, %v339
        %vm604 = vcmp.eq.s32.totalorder %v292, %v339
        %vm605 = vcmp.eq.s32.totalorder %v293, %v339
        %vm606 = vcmp.eq.s32.totalorder %v294, %v339
        %vm607 = vcmp.eq.s32.totalorder %v287, %v342
        %vm608 = vcmp.eq.s32.totalorder %v288, %v342
        %vm609 = vcmp.eq.s32.totalorder %v289, %v342
        %vm610 = vcmp.eq.s32.totalorder %v290, %v342
        %vm611 = vcmp.eq.s32.totalorder %v291, %v342
        %vm612 = vcmp.eq.s32.totalorder %v292, %v342
        %vm613 = vcmp.eq.s32.totalorder %v293, %v342
        %vm614 = vcmp.eq.s32.totalorder %v294, %v342
        %vm615 = vcmp.eq.s32.totalorder %v287, %v345
        %vm616 = vcmp.eq.s32.totalorder %v288, %v345
        %vm617 = vcmp.eq.s32.totalorder %v289, %v345
        %vm618 = vcmp.eq.s32.totalorder %v290, %v345
        %vm619 = vcmp.eq.s32.totalorder %v291, %v345
        %vm620 = vcmp.eq.s32.totalorder %v292, %v345
        %vm621 = vcmp.eq.s32.totalorder %v293, %v345
        %vm622 = vcmp.eq.s32.totalorder %v294, %v345
        %vm623 = vcmp.eq.s32.totalorder %v287, %v348
        %vm624 = vcmp.eq.s32.totalorder %v288, %v348
        %vm625 = vcmp.eq.s32.totalorder %v289, %v348
        %vm626 = vcmp.eq.s32.totalorder %v290, %v348
        %vm627 = vcmp.eq.s32.totalorder %v291, %v348
        %vm628 = vcmp.eq.s32.totalorder %v292, %v348
        %vm629 = vcmp.eq.s32.totalorder %v293, %v348
        %vm630 = vcmp.eq.s32.totalorder %v294, %v348
        %vm631 = vcmp.eq.s32.totalorder %v287, %v351
        %vm632 = vcmp.eq.s32.totalorder %v288, %v351
        %vm633 = vcmp.eq.s32.totalorder %v289, %v351
        %vm634 = vcmp.eq.s32.totalorder %v290, %v351
        %vm635 = vcmp.eq.s32.totalorder %v291, %v351
        %vm636 = vcmp.eq.s32.totalorder %v292, %v351
        %vm637 = vcmp.eq.s32.totalorder %v293, %v351
        %vm638 = vcmp.eq.s32.totalorder %v294, %v351
        %vm639 = vcmp.eq.s32.totalorder %v287, %v354
        %vm640 = vcmp.eq.s32.totalorder %v288, %v354
        %vm641 = vcmp.eq.s32.totalorder %v289, %v354
        %vm642 = vcmp.eq.s32.totalorder %v290, %v354
        %vm643 = vcmp.eq.s32.totalorder %v291, %v354
        %vm644 = vcmp.eq.s32.totalorder %v292, %v354
        %vm645 = vcmp.eq.s32.totalorder %v293, %v354
        %vm646 = vcmp.eq.s32.totalorder %v294, %v354
        %vm647 = vcmp.eq.s32.totalorder %v287, %v357
        %vm648 = vcmp.eq.s32.totalorder %v288, %v357
        %vm649 = vcmp.eq.s32.totalorder %v289, %v357
        %vm650 = vcmp.eq.s32.totalorder %v290, %v357
        %vm651 = vcmp.eq.s32.totalorder %v291, %v357
        %vm652 = vcmp.eq.s32.totalorder %v292, %v357
        %vm653 = vcmp.eq.s32.totalorder %v293, %v357
        %vm654 = vcmp.eq.s32.totalorder %v294, %v357
        %vm655 = vcmp.eq.s32.totalorder %v287, %v360
        %vm656 = vcmp.eq.s32.totalorder %v288, %v360
        %vm657 = vcmp.eq.s32.totalorder %v289, %v360
        %vm658 = vcmp.eq.s32.totalorder %v290, %v360
        %vm659 = vcmp.eq.s32.totalorder %v291, %v360
        %vm660 = vcmp.eq.s32.totalorder %v292, %v360
        %vm661 = vcmp.eq.s32.totalorder %v293, %v360
        %vm662 = vcmp.eq.s32.totalorder %v294, %v360
        %vm663 = vcmp.eq.s32.totalorder %v287, %v363
        %vm664 = vcmp.eq.s32.totalorder %v288, %v363
        %vm665 = vcmp.eq.s32.totalorder %v289, %v363
        %vm666 = vcmp.eq.s32.totalorder %v290, %v363
        %vm667 = vcmp.eq.s32.totalorder %v291, %v363
        %vm668 = vcmp.eq.s32.totalorder %v292, %v363
        %vm669 = vcmp.eq.s32.totalorder %v293, %v363
        %vm670 = vcmp.eq.s32.totalorder %v294, %v363
        %vm671 = vcmp.eq.s32.totalorder %v287, %v366
        %vm672 = vcmp.eq.s32.totalorder %v288, %v366
        %vm673 = vcmp.eq.s32.totalorder %v289, %v366
        %vm674 = vcmp.eq.s32.totalorder %v290, %v366
        %vm675 = vcmp.eq.s32.totalorder %v291, %v366
        %vm676 = vcmp.eq.s32.totalorder %v292, %v366
        %vm677 = vcmp.eq.s32.totalorder %v293, %v366
        %vm678 = vcmp.eq.s32.totalorder %v294, %v366
        %vm679 = vcmp.eq.s32.totalorder %v287, %v369
        %vm680 = vcmp.eq.s32.totalorder %v288, %v369
        %vm681 = vcmp.eq.s32.totalorder %v289, %v369
        %vm682 = vcmp.eq.s32.totalorder %v290, %v369
        %vm683 = vcmp.eq.s32.totalorder %v291, %v369
        %vm684 = vcmp.eq.s32.totalorder %v292, %v369
        %vm685 = vcmp.eq.s32.totalorder %v293, %v369
        %vm686 = vcmp.eq.s32.totalorder %v294, %v369
        %vm687 = vcmp.eq.s32.totalorder %v287, %v372
        %vm688 = vcmp.eq.s32.totalorder %v288, %v372
        %vm689 = vcmp.eq.s32.totalorder %v289, %v372
        %vm690 = vcmp.eq.s32.totalorder %v290, %v372
        %vm691 = vcmp.eq.s32.totalorder %v291, %v372
        %vm692 = vcmp.eq.s32.totalorder %v292, %v372
        %vm693 = vcmp.eq.s32.totalorder %v293, %v372
        %vm694 = vcmp.eq.s32.totalorder %v294, %v372
        %vm695 = vcmp.eq.s32.totalorder %v287, %v375
        %vm696 = vcmp.eq.s32.totalorder %v288, %v375
        %vm697 = vcmp.eq.s32.totalorder %v289, %v375
        %vm698 = vcmp.eq.s32.totalorder %v290, %v375
        %vm699 = vcmp.eq.s32.totalorder %v291, %v375
        %vm700 = vcmp.eq.s32.totalorder %v292, %v375
        %vm701 = vcmp.eq.s32.totalorder %v293, %v375
        %vm702 = vcmp.eq.s32.totalorder %v294, %v375
        %vm703 = vcmp.eq.s32.totalorder %v287, %v378
        %vm704 = vcmp.eq.s32.totalorder %v288, %v378
        %vm705 = vcmp.eq.s32.totalorder %v289, %v378
        %vm706 = vcmp.eq.s32.totalorder %v290, %v378
        %vm707 = vcmp.eq.s32.totalorder %v291, %v378
        %vm708 = vcmp.eq.s32.totalorder %v292, %v378
        %vm709 = vcmp.eq.s32.totalorder %v293, %v378
        %vm710 = vcmp.eq.s32.totalorder %v294, %v378
        %vm711 = vcmp.eq.s32.totalorder %v287, %v381
        %vm712 = vcmp.eq.s32.totalorder %v288, %v381
        %vm713 = vcmp.eq.s32.totalorder %v289, %v381
        %vm714 = vcmp.eq.s32.totalorder %v290, %v381
        %vm715 = vcmp.eq.s32.totalorder %v291, %v381
        %vm716 = vcmp.eq.s32.totalorder %v292, %v381
        %vm717 = vcmp.eq.s32.totalorder %v293, %v381
        %vm718 = vcmp.eq.s32.totalorder %v294, %v381
        %vm719 = vcmp.eq.s32.totalorder %v287, %v384
        %vm720 = vcmp.eq.s32.totalorder %v288, %v384
        %vm721 = vcmp.eq.s32.totalorder %v289, %v384
        %vm722 = vcmp.eq.s32.totalorder %v290, %v384
        %vm723 = vcmp.eq.s32.totalorder %v291, %v384
        %vm724 = vcmp.eq.s32.totalorder %v292, %v384
        %vm725 = vcmp.eq.s32.totalorder %v293, %v384
        %vm726 = vcmp.eq.s32.totalorder %v294, %v384
        %vm727 = vcmp.eq.s32.totalorder %v287, %v387
        %vm728 = vcmp.eq.s32.totalorder %v288, %v387
        %vm729 = vcmp.eq.s32.totalorder %v289, %v387
        %vm730 = vcmp.eq.s32.totalorder %v290, %v387
        %vm731 = vcmp.eq.s32.totalorder %v291, %v387
        %vm732 = vcmp.eq.s32.totalorder %v292, %v387
        %vm733 = vcmp.eq.s32.totalorder %v293, %v387
        %vm734 = vcmp.eq.s32.totalorder %v294, %v387
        %vm735 = vcmp.eq.s32.totalorder %v287, %v390
        %vm736 = vcmp.eq.s32.totalorder %v288, %v390
        %vm737 = vcmp.eq.s32.totalorder %v289, %v390
        %vm738 = vcmp.eq.s32.totalorder %v290, %v390
        %vm739 = vcmp.eq.s32.totalorder %v291, %v390
        %vm740 = vcmp.eq.s32.totalorder %v292, %v390
        %vm741 = vcmp.eq.s32.totalorder %v293, %v390
        %vm742 = vcmp.eq.s32.totalorder %v294, %v390
        %vm743 = vcmp.eq.s32.totalorder %v287, %v393
        %vm744 = vcmp.eq.s32.totalorder %v288, %v393
        %vm745 = vcmp.eq.s32.totalorder %v289, %v393
        %vm746 = vcmp.eq.s32.totalorder %v290, %v393
        %vm747 = vcmp.eq.s32.totalorder %v291, %v393
        %vm748 = vcmp.eq.s32.totalorder %v292, %v393
        %vm749 = vcmp.eq.s32.totalorder %v293, %v393
        %vm750 = vcmp.eq.s32.totalorder %v294, %v393
        %vm751 = vcmp.eq.s32.totalorder %v287, %v396
        %vm752 = vcmp.eq.s32.totalorder %v288, %v396
        %vm753 = vcmp.eq.s32.totalorder %v289, %v396
        %vm754 = vcmp.eq.s32.totalorder %v290, %v396
        %vm755 = vcmp.eq.s32.totalorder %v291, %v396
        %vm756 = vcmp.eq.s32.totalorder %v292, %v396
        %vm757 = vcmp.eq.s32.totalorder %v293, %v396
        %vm758 = vcmp.eq.s32.totalorder %v294, %v396
        %vm759 = vcmp.eq.s32.totalorder %v287, %v399
        %vm760 = vcmp.eq.s32.totalorder %v288, %v399
        %vm761 = vcmp.eq.s32.totalorder %v289, %v399
        %vm762 = vcmp.eq.s32.totalorder %v290, %v399
        %vm763 = vcmp.eq.s32.totalorder %v291, %v399
        %vm764 = vcmp.eq.s32.totalorder %v292, %v399
        %vm765 = vcmp.eq.s32.totalorder %v293, %v399
        %vm766 = vcmp.eq.s32.totalorder %v294, %v399
        %vm767 = vcmp.eq.s32.totalorder %v287, %v402
        %vm768 = vcmp.eq.s32.totalorder %v288, %v402
        %vm769 = vcmp.eq.s32.totalorder %v289, %v402
        %vm770 = vcmp.eq.s32.totalorder %v290, %v402
        %vm771 = vcmp.eq.s32.totalorder %v291, %v402
        %vm772 = vcmp.eq.s32.totalorder %v292, %v402
        %vm773 = vcmp.eq.s32.totalorder %v293, %v402
        %vm774 = vcmp.eq.s32.totalorder %v294, %v402
        %vm775 = vcmp.eq.s32.totalorder %v287, %v405
        %vm776 = vcmp.eq.s32.totalorder %v288, %v405
        %vm777 = vcmp.eq.s32.totalorder %v289, %v405
        %vm778 = vcmp.eq.s32.totalorder %v290, %v405
        %vm779 = vcmp.eq.s32.totalorder %v291, %v405
        %vm780 = vcmp.eq.s32.totalorder %v292, %v405
        %vm781 = vcmp.eq.s32.totalorder %v293, %v405
        %vm782 = vcmp.eq.s32.totalorder %v294, %v405
        %vm783 = vcmp.eq.s32.totalorder %v287, %v408
        %vm784 = vcmp.eq.s32.totalorder %v288, %v408
        %vm785 = vcmp.eq.s32.totalorder %v289, %v408
        %vm786 = vcmp.eq.s32.totalorder %v290, %v408
        %vm787 = vcmp.eq.s32.totalorder %v291, %v408
        %vm788 = vcmp.eq.s32.totalorder %v292, %v408
        %vm789 = vcmp.eq.s32.totalorder %v293, %v408
        %vm790 = vcmp.eq.s32.totalorder %v294, %v408
        %vm791 = vcmp.eq.s32.totalorder %v287, %v411
        %vm792 = vcmp.eq.s32.totalorder %v288, %v411
        %vm793 = vcmp.eq.s32.totalorder %v289, %v411
        %vm794 = vcmp.eq.s32.totalorder %v290, %v411
        %vm795 = vcmp.eq.s32.totalorder %v291, %v411
        %vm796 = vcmp.eq.s32.totalorder %v292, %v411
        %vm797 = vcmp.eq.s32.totalorder %v293, %v411
        %vm798 = vcmp.eq.s32.totalorder %v294, %v411
        %vm799 = vcmp.eq.s32.totalorder %v287, %v414
        %vm800 = vcmp.eq.s32.totalorder %v288, %v414
        %vm801 = vcmp.eq.s32.totalorder %v289, %v414
        %vm802 = vcmp.eq.s32.totalorder %v290, %v414
        %vm803 = vcmp.eq.s32.totalorder %v291, %v414
        %vm804 = vcmp.eq.s32.totalorder %v292, %v414
        %vm805 = vcmp.eq.s32.totalorder %v293, %v414
        %vm806 = vcmp.eq.s32.totalorder %v294, %v414
        %vm807 = vcmp.eq.s32.totalorder %v287, %v417
        %vm808 = vcmp.eq.s32.totalorder %v288, %v417
        %vm809 = vcmp.eq.s32.totalorder %v289, %v417
        %vm810 = vcmp.eq.s32.totalorder %v290, %v417
        %vm811 = vcmp.eq.s32.totalorder %v291, %v417
        %vm812 = vcmp.eq.s32.totalorder %v292, %v417
        %vm813 = vcmp.eq.s32.totalorder %v293, %v417
        %vm814 = vcmp.eq.s32.totalorder %v294, %v417
        %vm815 = vcmp.eq.s32.totalorder %v287, %v420
        %vm816 = vcmp.eq.s32.totalorder %v288, %v420
        %vm817 = vcmp.eq.s32.totalorder %v289, %v420
        %vm818 = vcmp.eq.s32.totalorder %v290, %v420
        %vm819 = vcmp.eq.s32.totalorder %v291, %v420
        %vm820 = vcmp.eq.s32.totalorder %v292, %v420
        %vm821 = vcmp.eq.s32.totalorder %v293, %v420
        %vm822 = vcmp.eq.s32.totalorder %v294, %v420
        %vm823 = vcmp.eq.s32.totalorder %v287, %v423
        %vm824 = vcmp.eq.s32.totalorder %v288, %v423
        %vm825 = vcmp.eq.s32.totalorder %v289, %v423
        %vm826 = vcmp.eq.s32.totalorder %v290, %v423
        %vm827 = vcmp.eq.s32.totalorder %v291, %v423
        %vm828 = vcmp.eq.s32.totalorder %v292, %v423
        %vm829 = vcmp.eq.s32.totalorder %v293, %v423
        %vm830 = vcmp.eq.s32.totalorder %v294, %v423
        %vm831 = vcmp.eq.s32.totalorder %v287, %v426
        %vm832 = vcmp.eq.s32.totalorder %v288, %v426
        %vm833 = vcmp.eq.s32.totalorder %v289, %v426
        %vm834 = vcmp.eq.s32.totalorder %v290, %v426
        %vm835 = vcmp.eq.s32.totalorder %v291, %v426
        %vm836 = vcmp.eq.s32.totalorder %v292, %v426
        %vm837 = vcmp.eq.s32.totalorder %v293, %v426
        %vm838 = vcmp.eq.s32.totalorder %v294, %v426
        %vm839 = vcmp.eq.s32.totalorder %v287, %v429
        %vm840 = vcmp.eq.s32.totalorder %v288, %v429
        %vm841 = vcmp.eq.s32.totalorder %v289, %v429
        %vm842 = vcmp.eq.s32.totalorder %v290, %v429
        %vm843 = vcmp.eq.s32.totalorder %v291, %v429
        %vm844 = vcmp.eq.s32.totalorder %v292, %v429
        %vm845 = vcmp.eq.s32.totalorder %v293, %v429
        %vm846 = vcmp.eq.s32.totalorder %v294, %v429
        %vm847 = vcmp.eq.s32.totalorder %v287, %v432
        %vm848 = vcmp.eq.s32.totalorder %v288, %v432
        %vm849 = vcmp.eq.s32.totalorder %v289, %v432
        %vm850 = vcmp.eq.s32.totalorder %v290, %v432
        %vm851 = vcmp.eq.s32.totalorder %v291, %v432
        %vm852 = vcmp.eq.s32.totalorder %v292, %v432
        %vm853 = vcmp.eq.s32.totalorder %v293, %v432
        %vm854 = vcmp.eq.s32.totalorder %v294, %v432
        %vm855 = vcmp.eq.s32.totalorder %v287, %v435
        %vm856 = vcmp.eq.s32.totalorder %v288, %v435
        %vm857 = vcmp.eq.s32.totalorder %v289, %v435
        %vm858 = vcmp.eq.s32.totalorder %v290, %v435
        %vm859 = vcmp.eq.s32.totalorder %v291, %v435
        %vm860 = vcmp.eq.s32.totalorder %v292, %v435
        %vm861 = vcmp.eq.s32.totalorder %v293, %v435
        %vm862 = vcmp.eq.s32.totalorder %v294, %v435
        %vm863 = vcmp.eq.s32.totalorder %v287, %v438
        %vm864 = vcmp.eq.s32.totalorder %v288, %v438
        %vm865 = vcmp.eq.s32.totalorder %v289, %v438
        %vm866 = vcmp.eq.s32.totalorder %v290, %v438
        %vm867 = vcmp.eq.s32.totalorder %v291, %v438
        %vm868 = vcmp.eq.s32.totalorder %v292, %v438
        %vm869 = vcmp.eq.s32.totalorder %v293, %v438
        %vm870 = vcmp.eq.s32.totalorder %v294, %v438
        %vm871 = vcmp.eq.s32.totalorder %v287, %v441
        %vm872 = vcmp.eq.s32.totalorder %v288, %v441
        %vm873 = vcmp.eq.s32.totalorder %v289, %v441
        %vm874 = vcmp.eq.s32.totalorder %v290, %v441
        %vm875 = vcmp.eq.s32.totalorder %v291, %v441
        %vm876 = vcmp.eq.s32.totalorder %v292, %v441
        %vm877 = vcmp.eq.s32.totalorder %v293, %v441
        %vm878 = vcmp.eq.s32.totalorder %v294, %v441
        %vm879 = vcmp.eq.s32.totalorder %v287, %v444
        %vm880 = vcmp.eq.s32.totalorder %v288, %v444
        %vm881 = vcmp.eq.s32.totalorder %v289, %v444
        %vm882 = vcmp.eq.s32.totalorder %v290, %v444
        %vm883 = vcmp.eq.s32.totalorder %v291, %v444
        %vm884 = vcmp.eq.s32.totalorder %v292, %v444
        %vm885 = vcmp.eq.s32.totalorder %v293, %v444
        %vm886 = vcmp.eq.s32.totalorder %v294, %v444
        %vm887 = vcmp.eq.s32.totalorder %v287, %v447
        %vm888 = vcmp.eq.s32.totalorder %v288, %v447
        %vm889 = vcmp.eq.s32.totalorder %v289, %v447
        %vm890 = vcmp.eq.s32.totalorder %v290, %v447
        %vm891 = vcmp.eq.s32.totalorder %v291, %v447
        %vm892 = vcmp.eq.s32.totalorder %v292, %v447
        %vm893 = vcmp.eq.s32.totalorder %v293, %v447
        %vm894 = vcmp.eq.s32.totalorder %v294, %v447
        %vm895 = vcmp.eq.s32.totalorder %v287, %v450
        %vm896 = vcmp.eq.s32.totalorder %v288, %v450
        %vm897 = vcmp.eq.s32.totalorder %v289, %v450
        %vm898 = vcmp.eq.s32.totalorder %v290, %v450
        %vm899 = vcmp.eq.s32.totalorder %v291, %v450
        %vm900 = vcmp.eq.s32.totalorder %v292, %v450
        %vm901 = vcmp.eq.s32.totalorder %v293, %v450
        %vm902 = vcmp.eq.s32.totalorder %v294, %v450
        %vm903 = vcmp.eq.s32.totalorder %v287, %v453
        %vm904 = vcmp.eq.s32.totalorder %v288, %v453
        %vm905 = vcmp.eq.s32.totalorder %v289, %v453
        %vm906 = vcmp.eq.s32.totalorder %v290, %v453
        %vm907 = vcmp.eq.s32.totalorder %v291, %v453
        %vm908 = vcmp.eq.s32.totalorder %v292, %v453
        %vm909 = vcmp.eq.s32.totalorder %v293, %v453
        %vm910 = vcmp.eq.s32.totalorder %v294, %v453
        %vm911 = vcmp.eq.s32.totalorder %v287, %v456
        %vm912 = vcmp.eq.s32.totalorder %v288, %v456
        %vm913 = vcmp.eq.s32.totalorder %v289, %v456
        %vm914 = vcmp.eq.s32.totalorder %v290, %v456
        %vm915 = vcmp.eq.s32.totalorder %v291, %v456
        %vm916 = vcmp.eq.s32.totalorder %v292, %v456
        %vm917 = vcmp.eq.s32.totalorder %v293, %v456
        %vm918 = vcmp.eq.s32.totalorder %v294, %v456
        %vm919 = vcmp.eq.s32.totalorder %v287, %v459
        %vm920 = vcmp.eq.s32.totalorder %v288, %v459
        %vm921 = vcmp.eq.s32.totalorder %v289, %v459
        %vm922 = vcmp.eq.s32.totalorder %v290, %v459
        %vm923 = vcmp.eq.s32.totalorder %v291, %v459
        %vm924 = vcmp.eq.s32.totalorder %v292, %v459
        %vm925 = vcmp.eq.s32.totalorder %v293, %v459
        %vm926 = vcmp.eq.s32.totalorder %v294, %v459
        %vm927 = vcmp.eq.s32.totalorder %v287, %v462
        %vm928 = vcmp.eq.s32.totalorder %v288, %v462
        %vm929 = vcmp.eq.s32.totalorder %v289, %v462
        %vm930 = vcmp.eq.s32.totalorder %v290, %v462
        %vm931 = vcmp.eq.s32.totalorder %v291, %v462
        %vm932 = vcmp.eq.s32.totalorder %v292, %v462
        %vm933 = vcmp.eq.s32.totalorder %v293, %v462
        %vm934 = vcmp.eq.s32.totalorder %v294, %v462
        %vm935 = vcmp.eq.s32.totalorder %v287, %v465
        %vm936 = vcmp.eq.s32.totalorder %v288, %v465
        %vm937 = vcmp.eq.s32.totalorder %v289, %v465
        %vm938 = vcmp.eq.s32.totalorder %v290, %v465
        %vm939 = vcmp.eq.s32.totalorder %v291, %v465
        %vm940 = vcmp.eq.s32.totalorder %v292, %v465
        %vm941 = vcmp.eq.s32.totalorder %v293, %v465
        %vm942 = vcmp.eq.s32.totalorder %v294, %v465
        %vm943 = vcmp.eq.s32.totalorder %v287, %v468
        %vm944 = vcmp.eq.s32.totalorder %v288, %v468
        %vm945 = vcmp.eq.s32.totalorder %v289, %v468
        %vm946 = vcmp.eq.s32.totalorder %v290, %v468
        %vm947 = vcmp.eq.s32.totalorder %v291, %v468
        %vm948 = vcmp.eq.s32.totalorder %v292, %v468
        %vm949 = vcmp.eq.s32.totalorder %v293, %v468
        %vm950 = vcmp.eq.s32.totalorder %v294, %v468
        %vm951 = vcmp.eq.s32.totalorder %v287, %v471
        %vm952 = vcmp.eq.s32.totalorder %v288, %v471
        %vm953 = vcmp.eq.s32.totalorder %v289, %v471
        %vm954 = vcmp.eq.s32.totalorder %v290, %v471
        %vm955 = vcmp.eq.s32.totalorder %v291, %v471
        %vm956 = vcmp.eq.s32.totalorder %v292, %v471
        %vm957 = vcmp.eq.s32.totalorder %v293, %v471
        %vm958 = vcmp.eq.s32.totalorder %v294, %v471
        %vm959 = vcmp.eq.s32.totalorder %v287, %v474
        %vm960 = vcmp.eq.s32.totalorder %v288, %v474
        %vm961 = vcmp.eq.s32.totalorder %v289, %v474
        %vm962 = vcmp.eq.s32.totalorder %v290, %v474
        %vm963 = vcmp.eq.s32.totalorder %v291, %v474
        %vm964 = vcmp.eq.s32.totalorder %v292, %v474
        %vm965 = vcmp.eq.s32.totalorder %v293, %v474
        %vm966 = vcmp.eq.s32.totalorder %v294, %v474
        %vm967 = vcmp.eq.s32.totalorder %v287, %v477
        %vm968 = vcmp.eq.s32.totalorder %v288, %v477
        %vm969 = vcmp.eq.s32.totalorder %v289, %v477
        %vm970 = vcmp.eq.s32.totalorder %v290, %v477
        %vm971 = vcmp.eq.s32.totalorder %v291, %v477
        %vm972 = vcmp.eq.s32.totalorder %v292, %v477
        %vm973 = vcmp.eq.s32.totalorder %v293, %v477
        %vm974 = vcmp.eq.s32.totalorder %v294, %v477
        %vm975 = vcmp.eq.s32.totalorder %v287, %v480
        %vm976 = vcmp.eq.s32.totalorder %v288, %v480
        %vm977 = vcmp.eq.s32.totalorder %v289, %v480
        %vm978 = vcmp.eq.s32.totalorder %v290, %v480
        %vm979 = vcmp.eq.s32.totalorder %v291, %v480
        %vm980 = vcmp.eq.s32.totalorder %v292, %v480
        %vm981 = vcmp.eq.s32.totalorder %v293, %v480
        %vm982 = vcmp.eq.s32.totalorder %v294, %v480
        %vm983 = vcmp.eq.s32.totalorder %v287, %v483
        %vm984 = vcmp.eq.s32.totalorder %v288, %v483
        %vm985 = vcmp.eq.s32.totalorder %v289, %v483
        %vm986 = vcmp.eq.s32.totalorder %v290, %v483
        %vm987 = vcmp.eq.s32.totalorder %v291, %v483
        %vm988 = vcmp.eq.s32.totalorder %v292, %v483
        %vm989 = vcmp.eq.s32.totalorder %v293, %v483
        %vm990 = vcmp.eq.s32.totalorder %v294, %v483
        %vm991 = vcmp.eq.s32.totalorder %v287, %v486
        %vm992 = vcmp.eq.s32.totalorder %v288, %v486
        %vm993 = vcmp.eq.s32.totalorder %v289, %v486
        %vm994 = vcmp.eq.s32.totalorder %v290, %v486
        %vm995 = vcmp.eq.s32.totalorder %v291, %v486
        %vm996 = vcmp.eq.s32.totalorder %v292, %v486
        %vm997 = vcmp.eq.s32.totalorder %v293, %v486
        %vm998 = vcmp.eq.s32.totalorder %v294, %v486
        %v999 = vsel %vm487, 1.0, 0.0
        %v1000 = vsel %vm488, 1.0, 0.0
        %v1001 = vsel %vm489, 1.0, 0.0
        %v1002 = vsel %vm490, 1.0, 0.0
        %v1003 = vsel %vm491, 1.0, 0.0
        %v1004 = vsel %vm492, 1.0, 0.0
        %v1005 = vsel %vm493, 1.0, 0.0
        %v1006 = vsel %vm494, 1.0, 0.0
        %v1007 = vsel %vm495, 1.0, 0.0
        %v1008 = vsel %vm496, 1.0, 0.0
        %v1009 = vsel %vm497, 1.0, 0.0
        %v1010 = vsel %vm498, 1.0, 0.0
        %v1011 = vsel %vm499, 1.0, 0.0
        %v1012 = vsel %vm500, 1.0, 0.0
        %v1013 = vsel %vm501, 1.0, 0.0
        %v1014 = vsel %vm502, 1.0, 0.0
        %v1015 = vsel %vm503, 1.0, 0.0
        %v1016 = vsel %vm504, 1.0, 0.0
        %v1017 = vsel %vm505, 1.0, 0.0
        %v1018 = vsel %vm506, 1.0, 0.0
        %v1019 = vsel %vm507, 1.0, 0.0
        %v1020 = vsel %vm508, 1.0, 0.0
        %v1021 = vsel %vm509, 1.0, 0.0
        %v1022 = vsel %vm510, 1.0, 0.0
        %v1023 = vsel %vm511, 1.0, 0.0
        %v1024 = vsel %vm512, 1.0, 0.0
        %v1025 = vsel %vm513, 1.0, 0.0
        %v1026 = vsel %vm514, 1.0, 0.0
        %v1027 = vsel %vm515, 1.0, 0.0
        %v1028 = vsel %vm516, 1.0, 0.0
        %v1029 = vsel %vm517, 1.0, 0.0
        %v1030 = vsel %vm518, 1.0, 0.0
        %v1031 = vsel %vm519, 1.0, 0.0
        %v1032 = vsel %vm520, 1.0, 0.0
        %v1033 = vsel %vm521, 1.0, 0.0
        %v1034 = vsel %vm522, 1.0, 0.0
        %v1035 = vsel %vm523, 1.0, 0.0
        %v1036 = vsel %vm524, 1.0, 0.0
        %v1037 = vsel %vm525, 1.0, 0.0
        %v1038 = vsel %vm526, 1.0, 0.0
        %v1039 = vsel %vm527, 1.0, 0.0
        %v1040 = vsel %vm528, 1.0, 0.0
        %v1041 = vsel %vm529, 1.0, 0.0
        %v1042 = vsel %vm530, 1.0, 0.0
        %v1043 = vsel %vm531, 1.0, 0.0
        %v1044 = vsel %vm532, 1.0, 0.0
        %v1045 = vsel %vm533, 1.0, 0.0
        %v1046 = vsel %vm534, 1.0, 0.0
        %v1047 = vsel %vm535, 1.0, 0.0
        %v1048 = vsel %vm536, 1.0, 0.0
        %v1049 = vsel %vm537, 1.0, 0.0
        %v1050 = vsel %vm538, 1.0, 0.0
        %v1051 = vsel %vm539, 1.0, 0.0
        %v1052 = vsel %vm540, 1.0, 0.0
        %v1053 = vsel %vm541, 1.0, 0.0
        %v1054 = vsel %vm542, 1.0, 0.0
        %v1055 = vsel %vm543, 1.0, 0.0
        %v1056 = vsel %vm544, 1.0, 0.0
        %v1057 = vsel %vm545, 1.0, 0.0
        %v1058 = vsel %vm546, 1.0, 0.0
        %v1059 = vsel %vm547, 1.0, 0.0
        %v1060 = vsel %vm548, 1.0, 0.0
        %v1061 = vsel %vm549, 1.0, 0.0
        %v1062 = vsel %vm550, 1.0, 0.0
        %v1063 = vsel %vm551, 1.0, 0.0
        %v1064 = vsel %vm552, 1.0, 0.0
        %v1065 = vsel %vm553, 1.0, 0.0
        %v1066 = vsel %vm554, 1.0, 0.0
        %v1067 = vsel %vm555, 1.0, 0.0
        %v1068 = vsel %vm556, 1.0, 0.0
        %v1069 = vsel %vm557, 1.0, 0.0
        %v1070 = vsel %vm558, 1.0, 0.0
        %v1071 = vsel %vm559, 1.0, 0.0
        %v1072 = vsel %vm560, 1.0, 0.0
        %v1073 = vsel %vm561, 1.0, 0.0
        %v1074 = vsel %vm562, 1.0, 0.0
        %v1075 = vsel %vm563, 1.0, 0.0
        %v1076 = vsel %vm564, 1.0, 0.0
        %v1077 = vsel %vm565, 1.0, 0.0
        %v1078 = vsel %vm566, 1.0, 0.0
        %v1079 = vsel %vm567, 1.0, 0.0
        %v1080 = vsel %vm568, 1.0, 0.0
        %v1081 = vsel %vm569, 1.0, 0.0
        %v1082 = vsel %vm570, 1.0, 0.0
        %v1083 = vsel %vm571, 1.0, 0.0
        %v1084 = vsel %vm572, 1.0, 0.0
        %v1085 = vsel %vm573, 1.0, 0.0
        %v1086 = vsel %vm574, 1.0, 0.0
        %v1087 = vsel %vm575, 1.0, 0.0
        %v1088 = vsel %vm576, 1.0, 0.0
        %v1089 = vsel %vm577, 1.0, 0.0
        %v1090 = vsel %vm578, 1.0, 0.0
        %v1091 = vsel %vm579, 1.0, 0.0
        %v1092 = vsel %vm580, 1.0, 0.0
        %v1093 = vsel %vm581, 1.0, 0.0
        %v1094 = vsel %vm582, 1.0, 0.0
        %v1095 = vsel %vm583, 1.0, 0.0
        %v1096 = vsel %vm584, 1.0, 0.0
        %v1097 = vsel %vm585, 1.0, 0.0
        %v1098 = vsel %vm586, 1.0, 0.0
        %v1099 = vsel %vm587, 1.0, 0.0
        %v1100 = vsel %vm588, 1.0, 0.0
        %v1101 = vsel %vm589, 1.0, 0.0
        %v1102 = vsel %vm590, 1.0, 0.0
        %v1103 = vsel %vm591, 1.0, 0.0
        %v1104 = vsel %vm592, 1.0, 0.0
        %v1105 = vsel %vm593, 1.0, 0.0
        %v1106 = vsel %vm594, 1.0, 0.0
        %v1107 = vsel %vm595, 1.0, 0.0
        %v1108 = vsel %vm596, 1.0, 0.0
        %v1109 = vsel %vm597, 1.0, 0.0
        %v1110 = vsel %vm598, 1.0, 0.0
        %v1111 = vsel %vm599, 1.0, 0.0
        %v1112 = vsel %vm600, 1.0, 0.0
        %v1113 = vsel %vm601, 1.0, 0.0
        %v1114 = vsel %vm602, 1.0, 0.0
        %v1115 = vsel %vm603, 1.0, 0.0
        %v1116 = vsel %vm604, 1.0, 0.0
        %v1117 = vsel %vm605, 1.0, 0.0
        %v1118 = vsel %vm606, 1.0, 0.0
        %v1119 = vsel %vm607, 1.0, 0.0
        %v1120 = vsel %vm608, 1.0, 0.0
        %v1121 = vsel %vm609, 1.0, 0.0
        %v1122 = vsel %vm610, 1.0, 0.0
        %v1123 = vsel %vm611, 1.0, 0.0
        %v1124 = vsel %vm612, 1.0, 0.0
        %v1125 = vsel %vm613, 1.0, 0.0
        %v1126 = vsel %vm614, 1.0, 0.0
        %v1127 = vsel %vm615, 1.0, 0.0
        %v1128 = vsel %vm616, 1.0, 0.0
        %v1129 = vsel %vm617, 1.0, 0.0
        %v1130 = vsel %vm618, 1.0, 0.0
        %v1131 = vsel %vm619, 1.0, 0.0
        %v1132 = vsel %vm620, 1.0, 0.0
        %v1133 = vsel %vm621, 1.0, 0.0
        %v1134 = vsel %vm622, 1.0, 0.0
        %v1135 = vsel %vm623, 1.0, 0.0
        %v1136 = vsel %vm624, 1.0, 0.0
        %v1137 = vsel %vm625, 1.0, 0.0
        %v1138 = vsel %vm626, 1.0, 0.0
        %v1139 = vsel %vm627, 1.0, 0.0
        %v1140 = vsel %vm628, 1.0, 0.0
        %v1141 = vsel %vm629, 1.0, 0.0
        %v1142 = vsel %vm630, 1.0, 0.0
        %v1143 = vsel %vm631, 1.0, 0.0
        %v1144 = vsel %vm632, 1.0, 0.0
        %v1145 = vsel %vm633, 1.0, 0.0
        %v1146 = vsel %vm634, 1.0, 0.0
        %v1147 = vsel %vm635, 1.0, 0.0
        %v1148 = vsel %vm636, 1.0, 0.0
        %v1149 = vsel %vm637, 1.0, 0.0
        %v1150 = vsel %vm638, 1.0, 0.0
        %v1151 = vsel %vm639, 1.0, 0.0
        %v1152 = vsel %vm640, 1.0, 0.0
        %v1153 = vsel %vm641, 1.0, 0.0
        %v1154 = vsel %vm642, 1.0, 0.0
        %v1155 = vsel %vm643, 1.0, 0.0
        %v1156 = vsel %vm644, 1.0, 0.0
        %v1157 = vsel %vm645, 1.0, 0.0
        %v1158 = vsel %vm646, 1.0, 0.0
        %v1159 = vsel %vm647, 1.0, 0.0
        %v1160 = vsel %vm648, 1.0, 0.0
        %v1161 = vsel %vm649, 1.0, 0.0
        %v1162 = vsel %vm650, 1.0, 0.0
        %v1163 = vsel %vm651, 1.0, 0.0
        %v1164 = vsel %vm652, 1.0, 0.0
        %v1165 = vsel %vm653, 1.0, 0.0
        %v1166 = vsel %vm654, 1.0, 0.0
        %v1167 = vsel %vm655, 1.0, 0.0
        %v1168 = vsel %vm656, 1.0, 0.0
        %v1169 = vsel %vm657, 1.0, 0.0
        %v1170 = vsel %vm658, 1.0, 0.0
        %v1171 = vsel %vm659, 1.0, 0.0
        %v1172 = vsel %vm660, 1.0, 0.0
        %v1173 = vsel %vm661, 1.0, 0.0
        %v1174 = vsel %vm662, 1.0, 0.0
        %v1175 = vsel %vm663, 1.0, 0.0
        %v1176 = vsel %vm664, 1.0, 0.0
        %v1177 = vsel %vm665, 1.0, 0.0
        %v1178 = vsel %vm666, 1.0, 0.0
        %v1179 = vsel %vm667, 1.0, 0.0
        %v1180 = vsel %vm668, 1.0, 0.0
        %v1181 = vsel %vm669, 1.0, 0.0
        %v1182 = vsel %vm670, 1.0, 0.0
        %v1183 = vsel %vm671, 1.0, 0.0
        %v1184 = vsel %vm672, 1.0, 0.0
        %v1185 = vsel %vm673, 1.0, 0.0
        %v1186 = vsel %vm674, 1.0, 0.0
        %v1187 = vsel %vm675, 1.0, 0.0
        %v1188 = vsel %vm676, 1.0, 0.0
        %v1189 = vsel %vm677, 1.0, 0.0
        %v1190 = vsel %vm678, 1.0, 0.0
        %v1191 = vsel %vm679, 1.0, 0.0
        %v1192 = vsel %vm680, 1.0, 0.0
        %v1193 = vsel %vm681, 1.0, 0.0
        %v1194 = vsel %vm682, 1.0, 0.0
        %v1195 = vsel %vm683, 1.0, 0.0
        %v1196 = vsel %vm684, 1.0, 0.0
        %v1197 = vsel %vm685, 1.0, 0.0
        %v1198 = vsel %vm686, 1.0, 0.0
        %v1199 = vsel %vm687, 1.0, 0.0
        %v1200 = vsel %vm688, 1.0, 0.0
        %v1201 = vsel %vm689, 1.0, 0.0
        %v1202 = vsel %vm690, 1.0, 0.0
        %v1203 = vsel %vm691, 1.0, 0.0
        %v1204 = vsel %vm692, 1.0, 0.0
        %v1205 = vsel %vm693, 1.0, 0.0
        %v1206 = vsel %vm694, 1.0, 0.0
        %v1207 = vsel %vm695, 1.0, 0.0
        %v1208 = vsel %vm696, 1.0, 0.0
        %v1209 = vsel %vm697, 1.0, 0.0
        %v1210 = vsel %vm698, 1.0, 0.0
        %v1211 = vsel %vm699, 1.0, 0.0
        %v1212 = vsel %vm700, 1.0, 0.0
        %v1213 = vsel %vm701, 1.0, 0.0
        %v1214 = vsel %vm702, 1.0, 0.0
        %v1215 = vsel %vm703, 1.0, 0.0
        %v1216 = vsel %vm704, 1.0, 0.0
        %v1217 = vsel %vm705, 1.0, 0.0
        %v1218 = vsel %vm706, 1.0, 0.0
        %v1219 = vsel %vm707, 1.0, 0.0
        %v1220 = vsel %vm708, 1.0, 0.0
        %v1221 = vsel %vm709, 1.0, 0.0
        %v1222 = vsel %vm710, 1.0, 0.0
        %v1223 = vsel %vm711, 1.0, 0.0
        %v1224 = vsel %vm712, 1.0, 0.0
        %v1225 = vsel %vm713, 1.0, 0.0
        %v1226 = vsel %vm714, 1.0, 0.0
        %v1227 = vsel %vm715, 1.0, 0.0
        %v1228 = vsel %vm716, 1.0, 0.0
        %v1229 = vsel %vm717, 1.0, 0.0
        %v1230 = vsel %vm718, 1.0, 0.0
        %v1231 = vsel %vm719, 1.0, 0.0
        %v1232 = vsel %vm720, 1.0, 0.0
        %v1233 = vsel %vm721, 1.0, 0.0
        %v1234 = vsel %vm722, 1.0, 0.0
        %v1235 = vsel %vm723, 1.0, 0.0
        %v1236 = vsel %vm724, 1.0, 0.0
        %v1237 = vsel %vm725, 1.0, 0.0
        %v1238 = vsel %vm726, 1.0, 0.0
        %v1239 = vsel %vm727, 1.0, 0.0
        %v1240 = vsel %vm728, 1.0, 0.0
        %v1241 = vsel %vm729, 1.0, 0.0
        %v1242 = vsel %vm730, 1.0, 0.0
        %v1243 = vsel %vm731, 1.0, 0.0
        %v1244 = vsel %vm732, 1.0, 0.0
        %v1245 = vsel %vm733, 1.0, 0.0
        %v1246 = vsel %vm734, 1.0, 0.0
        %v1247 = vsel %vm735, 1.0, 0.0
        %v1248 = vsel %vm736, 1.0, 0.0
        %v1249 = vsel %vm737, 1.0, 0.0
        %v1250 = vsel %vm738, 1.0, 0.0
        %v1251 = vsel %vm739, 1.0, 0.0
        %v1252 = vsel %vm740, 1.0, 0.0
        %v1253 = vsel %vm741, 1.0, 0.0
        %v1254 = vsel %vm742, 1.0, 0.0
        %v1255 = vsel %vm743, 1.0, 0.0
        %v1256 = vsel %vm744, 1.0, 0.0
        %v1257 = vsel %vm745, 1.0, 0.0
        %v1258 = vsel %vm746, 1.0, 0.0
        %v1259 = vsel %vm747, 1.0, 0.0
        %v1260 = vsel %vm748, 1.0, 0.0
        %v1261 = vsel %vm749, 1.0, 0.0
        %v1262 = vsel %vm750, 1.0, 0.0
        %v1263 = vsel %vm751, 1.0, 0.0
        %v1264 = vsel %vm752, 1.0, 0.0
        %v1265 = vsel %vm753, 1.0, 0.0
        %v1266 = vsel %vm754, 1.0, 0.0
        %v1267 = vsel %vm755, 1.0, 0.0
        %v1268 = vsel %vm756, 1.0, 0.0
        %v1269 = vsel %vm757, 1.0, 0.0
        %v1270 = vsel %vm758, 1.0, 0.0
        %v1271 = vsel %vm759, 1.0, 0.0
        %v1272 = vsel %vm760, 1.0, 0.0
        %v1273 = vsel %vm761, 1.0, 0.0
        %v1274 = vsel %vm762, 1.0, 0.0
        %v1275 = vsel %vm763, 1.0, 0.0
        %v1276 = vsel %vm764, 1.0, 0.0
        %v1277 = vsel %vm765, 1.0, 0.0
        %v1278 = vsel %vm766, 1.0, 0.0
        %v1279 = vsel %vm767, 1.0, 0.0
        %v1280 = vsel %vm768, 1.0, 0.0
        %v1281 = vsel %vm769, 1.0, 0.0
        %v1282 = vsel %vm770, 1.0, 0.0
        %v1283 = vsel %vm771, 1.0, 0.0
        %v1284 = vsel %vm772, 1.0, 0.0
        %v1285 = vsel %vm773, 1.0, 0.0
        %v1286 = vsel %vm774, 1.0, 0.0
        %v1287 = vsel %vm775, 1.0, 0.0
        %v1288 = vsel %vm776, 1.0, 0.0
        %v1289 = vsel %vm777, 1.0, 0.0
        %v1290 = vsel %vm778, 1.0, 0.0
        %v1291 = vsel %vm779, 1.0, 0.0
        %v1292 = vsel %vm780, 1.0, 0.0
        %v1293 = vsel %vm781, 1.0, 0.0
        %v1294 = vsel %vm782, 1.0, 0.0
        %v1295 = vsel %vm783, 1.0, 0.0
        %v1296 = vsel %vm784, 1.0, 0.0
        %v1297 = vsel %vm785, 1.0, 0.0
        %v1298 = vsel %vm786, 1.0, 0.0
        %v1299 = vsel %vm787, 1.0, 0.0
        %v1300 = vsel %vm788, 1.0, 0.0
        %v1301 = vsel %vm789, 1.0, 0.0
        %v1302 = vsel %vm790, 1.0, 0.0
        %v1303 = vsel %vm791, 1.0, 0.0
        %v1304 = vsel %vm792, 1.0, 0.0
        %v1305 = vsel %vm793, 1.0, 0.0
        %v1306 = vsel %vm794, 1.0, 0.0
        %v1307 = vsel %vm795, 1.0, 0.0
        %v1308 = vsel %vm796, 1.0, 0.0
        %v1309 = vsel %vm797, 1.0, 0.0
        %v1310 = vsel %vm798, 1.0, 0.0
        %v1311 = vsel %vm799, 1.0, 0.0
        %v1312 = vsel %vm800, 1.0, 0.0
        %v1313 = vsel %vm801, 1.0, 0.0
        %v1314 = vsel %vm802, 1.0, 0.0
        %v1315 = vsel %vm803, 1.0, 0.0
        %v1316 = vsel %vm804, 1.0, 0.0
        %v1317 = vsel %vm805, 1.0, 0.0
        %v1318 = vsel %vm806, 1.0, 0.0
        %v1319 = vsel %vm807, 1.0, 0.0
        %v1320 = vsel %vm808, 1.0, 0.0
        %v1321 = vsel %vm809, 1.0, 0.0
        %v1322 = vsel %vm810, 1.0, 0.0
        %v1323 = vsel %vm811, 1.0, 0.0
        %v1324 = vsel %vm812, 1.0, 0.0
        %v1325 = vsel %vm813, 1.0, 0.0
        %v1326 = vsel %vm814, 1.0, 0.0
        %v1327 = vsel %vm815, 1.0, 0.0
        %v1328 = vsel %vm816, 1.0, 0.0
        %v1329 = vsel %vm817, 1.0, 0.0
        %v1330 = vsel %vm818, 1.0, 0.0
        %v1331 = vsel %vm819, 1.0, 0.0
        %v1332 = vsel %vm820, 1.0, 0.0
        %v1333 = vsel %vm821, 1.0, 0.0
        %v1334 = vsel %vm822, 1.0, 0.0
        %v1335 = vsel %vm823, 1.0, 0.0
        %v1336 = vsel %vm824, 1.0, 0.0
        %v1337 = vsel %vm825, 1.0, 0.0
        %v1338 = vsel %vm826, 1.0, 0.0
        %v1339 = vsel %vm827, 1.0, 0.0
        %v1340 = vsel %vm828, 1.0, 0.0
        %v1341 = vsel %vm829, 1.0, 0.0
        %v1342 = vsel %vm830, 1.0, 0.0
        %v1343 = vsel %vm831, 1.0, 0.0
        %v1344 = vsel %vm832, 1.0, 0.0
        %v1345 = vsel %vm833, 1.0, 0.0
        %v1346 = vsel %vm834, 1.0, 0.0
        %v1347 = vsel %vm835, 1.0, 0.0
        %v1348 = vsel %vm836, 1.0, 0.0
        %v1349 = vsel %vm837, 1.0, 0.0
        %v1350 = vsel %vm838, 1.0, 0.0
        %v1351 = vsel %vm839, 1.0, 0.0
        %v1352 = vsel %vm840, 1.0, 0.0
        %v1353 = vsel %vm841, 1.0, 0.0
        %v1354 = vsel %vm842, 1.0, 0.0
        %v1355 = vsel %vm843, 1.0, 0.0
        %v1356 = vsel %vm844, 1.0, 0.0
        %v1357 = vsel %vm845, 1.0, 0.0
        %v1358 = vsel %vm846, 1.0, 0.0
        %v1359 = vsel %vm847, 1.0, 0.0
        %v1360 = vsel %vm848, 1.0, 0.0
        %v1361 = vsel %vm849, 1.0, 0.0
        %v1362 = vsel %vm850, 1.0, 0.0
        %v1363 = vsel %vm851, 1.0, 0.0
        %v1364 = vsel %vm852, 1.0, 0.0
        %v1365 = vsel %vm853, 1.0, 0.0
        %v1366 = vsel %vm854, 1.0, 0.0
        %v1367 = vsel %vm855, 1.0, 0.0
        %v1368 = vsel %vm856, 1.0, 0.0
        %v1369 = vsel %vm857, 1.0, 0.0
        %v1370 = vsel %vm858, 1.0, 0.0
        %v1371 = vsel %vm859, 1.0, 0.0
        %v1372 = vsel %vm860, 1.0, 0.0
        %v1373 = vsel %vm861, 1.0, 0.0
        %v1374 = vsel %vm862, 1.0, 0.0
        %v1375 = vsel %vm863, 1.0, 0.0
        %v1376 = vsel %vm864, 1.0, 0.0
        %v1377 = vsel %vm865, 1.0, 0.0
        %v1378 = vsel %vm866, 1.0, 0.0
        %v1379 = vsel %vm867, 1.0, 0.0
        %v1380 = vsel %vm868, 1.0, 0.0
        %v1381 = vsel %vm869, 1.0, 0.0
        %v1382 = vsel %vm870, 1.0, 0.0
        %v1383 = vsel %vm871, 1.0, 0.0
        %v1384 = vsel %vm872, 1.0, 0.0
        %v1385 = vsel %vm873, 1.0, 0.0
        %v1386 = vsel %vm874, 1.0, 0.0
        %v1387 = vsel %vm875, 1.0, 0.0
        %v1388 = vsel %vm876, 1.0, 0.0
        %v1389 = vsel %vm877, 1.0, 0.0
        %v1390 = vsel %vm878, 1.0, 0.0
        %v1391 = vsel %vm879, 1.0, 0.0
        %v1392 = vsel %vm880, 1.0, 0.0
        %v1393 = vsel %vm881, 1.0, 0.0
        %v1394 = vsel %vm882, 1.0, 0.0
        %v1395 = vsel %vm883, 1.0, 0.0
        %v1396 = vsel %vm884, 1.0, 0.0
        %v1397 = vsel %vm885, 1.0, 0.0
        %v1398 = vsel %vm886, 1.0, 0.0
        %v1399 = vsel %vm887, 1.0, 0.0
        %v1400 = vsel %vm888, 1.0, 0.0
        %v1401 = vsel %vm889, 1.0, 0.0
        %v1402 = vsel %vm890, 1.0, 0.0
        %v1403 = vsel %vm891, 1.0, 0.0
        %v1404 = vsel %vm892, 1.0, 0.0
        %v1405 = vsel %vm893, 1.0, 0.0
        %v1406 = vsel %vm894, 1.0, 0.0
        %v1407 = vsel %vm895, 1.0, 0.0
        %v1408 = vsel %vm896, 1.0, 0.0
        %v1409 = vsel %vm897, 1.0, 0.0
        %v1410 = vsel %vm898, 1.0, 0.0
        %v1411 = vsel %vm899, 1.0, 0.0
        %v1412 = vsel %vm900, 1.0, 0.0
        %v1413 = vsel %vm901, 1.0, 0.0
        %v1414 = vsel %vm902, 1.0, 0.0
        %v1415 = vsel %vm903, 1.0, 0.0
        %v1416 = vsel %vm904, 1.0, 0.0
        %v1417 = vsel %vm905, 1.0, 0.0
        %v1418 = vsel %vm906, 1.0, 0.0
        %v1419 = vsel %vm907, 1.0, 0.0
        %v1420 = vsel %vm908, 1.0, 0.0
        %v1421 = vsel %vm909, 1.0, 0.0
        %v1422 = vsel %vm910, 1.0, 0.0
        %v1423 = vsel %vm911, 1.0, 0.0
        %v1424 = vsel %vm912, 1.0, 0.0
        %v1425 = vsel %vm913, 1.0, 0.0
        %v1426 = vsel %vm914, 1.0, 0.0
        %v1427 = vsel %vm915, 1.0, 0.0
        %v1428 = vsel %vm916, 1.0, 0.0
        %v1429 = vsel %vm917, 1.0, 0.0
        %v1430 = vsel %vm918, 1.0, 0.0
        %v1431 = vsel %vm919, 1.0, 0.0
        %v1432 = vsel %vm920, 1.0, 0.0
        %v1433 = vsel %vm921, 1.0, 0.0
        %v1434 = vsel %vm922, 1.0, 0.0
        %v1435 = vsel %vm923, 1.0, 0.0
        %v1436 = vsel %vm924, 1.0, 0.0
        %v1437 = vsel %vm925, 1.0, 0.0
        %v1438 = vsel %vm926, 1.0, 0.0
        %v1439 = vsel %vm927, 1.0, 0.0
        %v1440 = vsel %vm928, 1.0, 0.0
        %v1441 = vsel %vm929, 1.0, 0.0
        %v1442 = vsel %vm930, 1.0, 0.0
        %v1443 = vsel %vm931, 1.0, 0.0
        %v1444 = vsel %vm932, 1.0, 0.0
        %v1445 = vsel %vm933, 1.0, 0.0
        %v1446 = vsel %vm934, 1.0, 0.0
        %v1447 = vsel %vm935, 1.0, 0.0
        %v1448 = vsel %vm936, 1.0, 0.0
        %v1449 = vsel %vm937, 1.0, 0.0
        %v1450 = vsel %vm938, 1.0, 0.0
        %v1451 = vsel %vm939, 1.0, 0.0
        %v1452 = vsel %vm940, 1.0, 0.0
        %v1453 = vsel %vm941, 1.0, 0.0
        %v1454 = vsel %vm942, 1.0, 0.0
        %v1455 = vsel %vm943, 1.0, 0.0
        %v1456 = vsel %vm944, 1.0, 0.0
        %v1457 = vsel %vm945, 1.0, 0.0
        %v1458 = vsel %vm946, 1.0, 0.0
        %v1459 = vsel %vm947, 1.0, 0.0
        %v1460 = vsel %vm948, 1.0, 0.0
        %v1461 = vsel %vm949, 1.0, 0.0
        %v1462 = vsel %vm950, 1.0, 0.0
        %v1463 = vsel %vm951, 1.0, 0.0
        %v1464 = vsel %vm952, 1.0, 0.0
        %v1465 = vsel %vm953, 1.0, 0.0
        %v1466 = vsel %vm954, 1.0, 0.0
        %v1467 = vsel %vm955, 1.0, 0.0
        %v1468 = vsel %vm956, 1.0, 0.0
        %v1469 = vsel %vm957, 1.0, 0.0
        %v1470 = vsel %vm958, 1.0, 0.0
        %v1471 = vsel %vm959, 1.0, 0.0
        %v1472 = vsel %vm960, 1.0, 0.0
        %v1473 = vsel %vm961, 1.0, 0.0
        %v1474 = vsel %vm962, 1.0, 0.0
        %v1475 = vsel %vm963, 1.0, 0.0
        %v1476 = vsel %vm964, 1.0, 0.0
        %v1477 = vsel %vm965, 1.0, 0.0
        %v1478 = vsel %vm966, 1.0, 0.0
        %v1479 = vsel %vm967, 1.0, 0.0
        %v1480 = vsel %vm968, 1.0, 0.0
        %v1481 = vsel %vm969, 1.0, 0.0
        %v1482 = vsel %vm970, 1.0, 0.0
        %v1483 = vsel %vm971, 1.0, 0.0
        %v1484 = vsel %vm972, 1.0, 0.0
        %v1485 = vsel %vm973, 1.0, 0.0
        %v1486 = vsel %vm974, 1.0, 0.0
        %v1487 = vsel %vm975, 1.0, 0.0
        %v1488 = vsel %vm976, 1.0, 0.0
        %v1489 = vsel %vm977, 1.0, 0.0
        %v1490 = vsel %vm978, 1.0, 0.0
        %v1491 = vsel %vm979, 1.0, 0.0
        %v1492 = vsel %vm980, 1.0, 0.0
        %v1493 = vsel %vm981, 1.0, 0.0
        %v1494 = vsel %vm982, 1.0, 0.0
        %v1495 = vsel %vm983, 1.0, 0.0
        %v1496 = vsel %vm984, 1.0, 0.0
        %v1497 = vsel %vm985, 1.0, 0.0
        %v1498 = vsel %vm986, 1.0, 0.0
        %v1499 = vsel %vm987, 1.0, 0.0
        %v1500 = vsel %vm988, 1.0, 0.0
        %v1501 = vsel %vm989, 1.0, 0.0
        %v1502 = vsel %vm990, 1.0, 0.0
        %v1503 = vsel %vm991, 1.0, 0.0
        %v1504 = vsel %vm992, 1.0, 0.0
        %v1505 = vsel %vm993, 1.0, 0.0
        %v1506 = vsel %vm994, 1.0, 0.0
        %v1507 = vsel %vm995, 1.0, 0.0
        %v1508 = vsel %vm996, 1.0, 0.0
        %v1509 = vsel %vm997, 1.0, 0.0
        %v1510 = vsel %vm998, 1.0, 0.0
        %1511 = vmatprep.subr.mxu0 %v1000
        %1512 = vmatpush1.msra.mxu0 %v999
        %1513 = vmatprep.subr.mxu0 %v1008
        %1514 = vmatpush1.msra.mxu0 %v1007
        %1515 = vmatprep.subr.mxu0 %v1016
        %1516 = vmatpush1.msra.mxu0 %v1015
        %1517 = vmatprep.subr.mxu0 %v1024
        %1518 = vmatpush1.msra.mxu0 %v1023
        %1519 = vmatprep.subr.mxu0 %v1032
        %1520 = vmatpush1.msra.mxu0 %v1031
        %1521 = vmatprep.subr.mxu0 %v1040
        %1522 = vmatpush1.msra.mxu0 %v1039
        %1523 = vmatprep.subr.mxu0 %v1048
        %1524 = vmatpush1.msra.mxu0 %v1047
        %1525 = vmatprep.subr.mxu0 %v1056
        %1526 = vmatpush1.msra.mxu0 %v1055
        %1527 = vmatprep.subr.mxu0 %v1064
        %1528 = vmatpush1.msra.mxu0 %v1063
        %1529 = vmatprep.subr.mxu0 %v1072
        %1530 = vmatpush1.msra.mxu0 %v1071
        %1531 = vmatprep.subr.mxu0 %v1080
        %1532 = vmatpush1.msra.mxu0 %v1079
        %1533 = vmatprep.subr.mxu0 %v1088
        %1534 = vmatpush1.msra.mxu0 %v1087
        %1535 = vmatprep.subr.mxu0 %v1096
        %1536 = vmatpush1.msra.mxu0 %v1095
        %1537 = vmatprep.subr.mxu0 %v1104
        %1538 = vmatpush1.msra.mxu0 %v1103
        %1539 = vmatprep.subr.mxu0 %v1112
        %1540 = vmatpush1.msra.mxu0 %v1111
        %1541 = vmatprep.subr.mxu0 %v1120
        %1542 = vmatpush1.msra.mxu0 %v1119
        %1543 = vmatprep.subr.mxu0 %v1128
        %1544 = vmatpush1.msra.mxu0 %v1127
        %1545 = vmatprep.subr.mxu0 %v1136
        %1546 = vmatpush1.msra.mxu0 %v1135
        %1547 = vmatprep.subr.mxu0 %v1144
        %1548 = vmatpush1.msra.mxu0 %v1143
        %1549 = vmatprep.subr.mxu0 %v1152
        %1550 = vmatpush1.msra.mxu0 %v1151
        %1551 = vmatprep.subr.mxu0 %v1160
        %1552 = vmatpush1.msra.mxu0 %v1159
        %1553 = vmatprep.subr.mxu0 %v1168
        %1554 = vmatpush1.msra.mxu0 %v1167
        %1555 = vmatprep.subr.mxu0 %v1176
        %1556 = vmatpush1.msra.mxu0 %v1175
        %1557 = vmatprep.subr.mxu0 %v1184
        %1558 = vmatpush1.msra.mxu0 %v1183
        %1559 = vmatprep.subr.mxu0 %v1192
        %1560 = vmatpush1.msra.mxu0 %v1191
        %1561 = vmatprep.subr.mxu0 %v1200
        %1562 = vmatpush1.msra.mxu0 %v1199
        %1563 = vmatprep.subr.mxu0 %v1208
        %1564 = vmatpush1.msra.mxu0 %v1207
        %1565 = vmatprep.subr.mxu0 %v1216
        %1566 = vmatpush1.msra.mxu0 %v1215
        %1567 = vmatprep.subr.mxu0 %v1224
        %1568 = vmatpush1.msra.mxu0 %v1223
        %1569 = vmatprep.subr.mxu0 %v1232
        %1570 = vmatpush1.msra.mxu0 %v1231
        %1571 = vmatprep.subr.mxu0 %v1240
        %1572 = vmatpush1.msra.mxu0 %v1239
        %1573 = vmatprep.subr.mxu0 %v1248
        %1574 = vmatpush1.msra.mxu0 %v1247
        %1575 = vmatprep.mubr.f32.mxu0 %v219
        %1576 = vmatmul.mubr.f32.gmra.mrb[0].mxu0 %v218
        %v1577 = vpop.f32.mrb[0].mxu0
        %v1578 = vadd.f32 0.0, %v1577
        %v1579 = vpop.f32.mrb[0].mxu0
        %v1580 = vadd.f32 0.0, %v1579
        %1581 = vdwg.mxu0
        %1582 = vmatprep.subr.mxu0 %v1256
        %1583 = vmatpush1.msra.mxu0 %v1255
        %1584 = vmatprep.subr.mxu0 %v1264
        %1585 = vmatpush1.msra.mxu0 %v1263
        %1586 = vmatprep.subr.mxu0 %v1272
        %1587 = vmatpush1.msra.mxu0 %v1271
        %1588 = vmatprep.subr.mxu0 %v1280
        %1589 = vmatpush1.msra.mxu0 %v1279
        %1590 = vmatprep.subr.mxu0 %v1288
        %1591 = vmatpush1.msra.mxu0 %v1287
        %1592 = vmatprep.subr.mxu0 %v1296
        %1593 = vmatpush1.msra.mxu0 %v1295
        %1594 = vmatprep.subr.mxu0 %v1304
        %1595 = vmatpush1.msra.mxu0 %v1303
        %1596 = vmatprep.subr.mxu0 %v1312
        %1597 = vmatpush1.msra.mxu0 %v1311
        %1598 = vmatprep.subr.mxu0 %v1320
        %1599 = vmatpush1.msra.mxu0 %v1319
        %1600 = vmatprep.subr.mxu0 %v1328
        %1601 = vmatpush1.msra.mxu0 %v1327
        %1602 = vmatprep.subr.mxu0 %v1336
        %1603 = vmatpush1.msra.mxu0 %v1335
        %1604 = vmatprep.subr.mxu0 %v1344
        %1605 = vmatpush1.msra.mxu0 %v1343
        %1606 = vmatprep.subr.mxu0 %v1352
        %1607 = vmatpush1.msra.mxu0 %v1351
        %1608 = vmatprep.subr.mxu0 %v1360
        %1609 = vmatpush1.msra.mxu0 %v1359
        %1610 = vmatprep.subr.mxu0 %v1368
        %1611 = vmatpush1.msra.mxu0 %v1367
        %1612 = vmatprep.subr.mxu0 %v1376
        %1613 = vmatpush1.msra.mxu0 %v1375
        %1614 = vmatprep.subr.mxu0 %v1384
        %1615 = vmatpush1.msra.mxu0 %v1383
        %1616 = vmatprep.subr.mxu0 %v1392
        %1617 = vmatpush1.msra.mxu0 %v1391
        %1618 = vmatprep.subr.mxu0 %v1400
        %1619 = vmatpush1.msra.mxu0 %v1399
        %1620 = vmatprep.subr.mxu0 %v1408
        %1621 = vmatpush1.msra.mxu0 %v1407
        %1622 = vmatprep.subr.mxu0 %v1416
        %1623 = vmatpush1.msra.mxu0 %v1415
        %1624 = vmatprep.subr.mxu0 %v1424
        %1625 = vmatpush1.msra.mxu0 %v1423
        %1626 = vmatprep.subr.mxu0 %v1432
        %1627 = vmatpush1.msra.mxu0 %v1431
        %1628 = vmatprep.subr.mxu0 %v1440
        %1629 = vmatpush1.msra.mxu0 %v1439
        %1630 = vmatprep.subr.mxu0 %v1448
        %1631 = vmatpush1.msra.mxu0 %v1447
        %1632 = vmatprep.subr.mxu0 %v1456
        %1633 = vmatpush1.msra.mxu0 %v1455
        %1634 = vmatprep.subr.mxu0 %v1464
        %1635 = vmatpush1.msra.mxu0 %v1463
        %1636 = vmatprep.subr.mxu0 %v1472
        %1637 = vmatpush1.msra.mxu0 %v1471
        %1638 = vmatprep.subr.mxu0 %v1480
        %1639 = vmatpush1.msra.mxu0 %v1479
        %1640 = vmatprep.subr.mxu0 %v1488
        %1641 = vmatpush1.msra.mxu0 %v1487
        %1642 = vmatprep.subr.mxu0 %v1496
        %1643 = vmatpush1.msra.mxu0 %v1495
        %1644 = vmatprep.subr.mxu0 %v1504
        %1645 = vmatpush1.msra.mxu0 %v1503
        %1646 = vmatprep.mubr.f32.mxu0 %v221
        %1647 = vmatmul.mubr.f32.gmra.mrb[0].mxu0 %v220
        %v1648 = vpop.f32.mrb[0].mxu0
        %v1649 = vadd.f32 %v1578, %v1648
        %v1650 = vpop.f32.mrb[0].mxu0
        %v1651 = vadd.f32 %v1580, %v1650
        %1652 = vdwg.mxu0
        %1653 = vmatprep.subr.mxu0 %v1002
        %1654 = vmatpush1.msra.mxu0 %v1001
        %1655 = vmatprep.subr.mxu0 %v1010
        %1656 = vmatpush1.msra.mxu0 %v1009
        %1657 = vmatprep.subr.mxu0 %v1018
        %1658 = vmatpush1.msra.mxu0 %v1017
        %1659 = vmatprep.subr.mxu0 %v1026
        %1660 = vmatpush1.msra.mxu0 %v1025
        %1661 = vmatprep.subr.mxu0 %v1034
        %1662 = vmatpush1.msra.mxu0 %v1033
        %1663 = vmatprep.subr.mxu0 %v1042
        %1664 = vmatpush1.msra.mxu0 %v1041
        %1665 = vmatprep.subr.mxu0 %v1050
        %1666 = vmatpush1.msra.mxu0 %v1049
        %1667 = vmatprep.subr.mxu0 %v1058
        %1668 = vmatpush1.msra.mxu0 %v1057
        %1669 = vmatprep.subr.mxu0 %v1066
        %1670 = vmatpush1.msra.mxu0 %v1065
        %1671 = vmatprep.subr.mxu0 %v1074
        %1672 = vmatpush1.msra.mxu0 %v1073
        %1673 = vmatprep.subr.mxu0 %v1082
        %1674 = vmatpush1.msra.mxu0 %v1081
        %1675 = vmatprep.subr.mxu0 %v1090
        %1676 = vmatpush1.msra.mxu0 %v1089
        %1677 = vmatprep.subr.mxu0 %v1098
        %1678 = vmatpush1.msra.mxu0 %v1097
        %1679 = vmatprep.subr.mxu0 %v1106
        %1680 = vmatpush1.msra.mxu0 %v1105
        %1681 = vmatprep.subr.mxu0 %v1114
        %1682 = vmatpush1.msra.mxu0 %v1113
        %1683 = vmatprep.subr.mxu0 %v1122
        %1684 = vmatpush1.msra.mxu0 %v1121
        %1685 = vmatprep.subr.mxu0 %v1130
        %1686 = vmatpush1.msra.mxu0 %v1129
        %1687 = vmatprep.subr.mxu0 %v1138
        %1688 = vmatpush1.msra.mxu0 %v1137
        %1689 = vmatprep.subr.mxu0 %v1146
        %1690 = vmatpush1.msra.mxu0 %v1145
        %1691 = vmatprep.subr.mxu0 %v1154
        %1692 = vmatpush1.msra.mxu0 %v1153
        %1693 = vmatprep.subr.mxu0 %v1162
        %1694 = vmatpush1.msra.mxu0 %v1161
        %1695 = vmatprep.subr.mxu0 %v1170
        %1696 = vmatpush1.msra.mxu0 %v1169
        %1697 = vmatprep.subr.mxu0 %v1178
        %1698 = vmatpush1.msra.mxu0 %v1177
        %1699 = vmatprep.subr.mxu0 %v1186
        %1700 = vmatpush1.msra.mxu0 %v1185
        %1701 = vmatprep.subr.mxu0 %v1194
        %1702 = vmatpush1.msra.mxu0 %v1193
        %1703 = vmatprep.subr.mxu0 %v1202
        %1704 = vmatpush1.msra.mxu0 %v1201
        %1705 = vmatprep.subr.mxu0 %v1210
        %1706 = vmatpush1.msra.mxu0 %v1209
        %1707 = vmatprep.subr.mxu0 %v1218
        %1708 = vmatpush1.msra.mxu0 %v1217
        %1709 = vmatprep.subr.mxu0 %v1226
        %1710 = vmatpush1.msra.mxu0 %v1225
        %1711 = vmatprep.subr.mxu0 %v1234
        %1712 = vmatpush1.msra.mxu0 %v1233
        %1713 = vmatprep.subr.mxu0 %v1242
        %1714 = vmatpush1.msra.mxu0 %v1241
        %1715 = vmatprep.subr.mxu0 %v1250
        %1716 = vmatpush1.msra.mxu0 %v1249
        %1717 = vmatprep.mubr.f32.mxu0 %v219
        %1718 = vmatmul.mubr.f32.gmra.mrb[0].mxu0 %v218
        %v1719 = vpop.f32.mrb[0].mxu0
        %v1720 = vadd.f32 0.0, %v1719
        %v1721 = vpop.f32.mrb[0].mxu0
        %v1722 = vadd.f32 0.0, %v1721
        %1723 = vdwg.mxu0
        %1724 = vmatprep.subr.mxu0 %v1258
        %1725 = vmatpush1.msra.mxu0 %v1257
        %1726 = vmatprep.subr.mxu0 %v1266
        %1727 = vmatpush1.msra.mxu0 %v1265
        %1728 = vmatprep.subr.mxu0 %v1274
        %1729 = vmatpush1.msra.mxu0 %v1273
        %1730 = vmatprep.subr.mxu0 %v1282
        %1731 = vmatpush1.msra.mxu0 %v1281
        %1732 = vmatprep.subr.mxu0 %v1290
        %1733 = vmatpush1.msra.mxu0 %v1289
        %1734 = vmatprep.subr.mxu0 %v1298
        %1735 = vmatpush1.msra.mxu0 %v1297
        %1736 = vmatprep.subr.mxu0 %v1306
        %1737 = vmatpush1.msra.mxu0 %v1305
        %1738 = vmatprep.subr.mxu0 %v1314
        %1739 = vmatpush1.msra.mxu0 %v1313
        %1740 = vmatprep.subr.mxu0 %v1322
        %1741 = vmatpush1.msra.mxu0 %v1321
        %1742 = vmatprep.subr.mxu0 %v1330
        %1743 = vmatpush1.msra.mxu0 %v1329
        %1744 = vmatprep.subr.mxu0 %v1338
        %1745 = vmatpush1.msra.mxu0 %v1337
        %1746 = vmatprep.subr.mxu0 %v1346
        %1747 = vmatpush1.msra.mxu0 %v1345
        %1748 = vmatprep.subr.mxu0 %v1354
        %1749 = vmatpush1.msra.mxu0 %v1353
        %1750 = vmatprep.subr.mxu0 %v1362
        %1751 = vmatpush1.msra.mxu0 %v1361
        %1752 = vmatprep.subr.mxu0 %v1370
        %1753 = vmatpush1.msra.mxu0 %v1369
        %1754 = vmatprep.subr.mxu0 %v1378
        %1755 = vmatpush1.msra.mxu0 %v1377
        %1756 = vmatprep.subr.mxu0 %v1386
        %1757 = vmatpush1.msra.mxu0 %v1385
        %1758 = vmatprep.subr.mxu0 %v1394
        %1759 = vmatpush1.msra.mxu0 %v1393
        %1760 = vmatprep.subr.mxu0 %v1402
        %1761 = vmatpush1.msra.mxu0 %v1401
        %1762 = vmatprep.subr.mxu0 %v1410
        %1763 = vmatpush1.msra.mxu0 %v1409
        %1764 = vmatprep.subr.mxu0 %v1418
        %1765 = vmatpush1.msra.mxu0 %v1417
        %1766 = vmatprep.subr.mxu0 %v1426
        %1767 = vmatpush1.msra.mxu0 %v1425
        %1768 = vmatprep.subr.mxu0 %v1434
        %1769 = vmatpush1.msra.mxu0 %v1433
        %1770 = vmatprep.subr.mxu0 %v1442
        %1771 = vmatpush1.msra.mxu0 %v1441
        %1772 = vmatprep.subr.mxu0 %v1450
        %1773 = vmatpush1.msra.mxu0 %v1449
        %1774 = vmatprep.subr.mxu0 %v1458
        %1775 = vmatpush1.msra.mxu0 %v1457
        %1776 = vmatprep.subr.mxu0 %v1466
        %1777 = vmatpush1.msra.mxu0 %v1465
        %1778 = vmatprep.subr.mxu0 %v1474
        %1779 = vmatpush1.msra.mxu0 %v1473
        %1780 = vmatprep.subr.mxu0 %v1482
        %1781 = vmatpush1.msra.mxu0 %v1481
        %1782 = vmatprep.subr.mxu0 %v1490
        %1783 = vmatpush1.msra.mxu0 %v1489
        %1784 = vmatprep.subr.mxu0 %v1498
        %1785 = vmatpush1.msra.mxu0 %v1497
        %1786 = vmatprep.subr.mxu0 %v1506
        %1787 = vmatpush1.msra.mxu0 %v1505
        %1788 = vmatprep.mubr.f32.mxu0 %v221
        %1789 = vmatmul.mubr.f32.gmra.mrb[0].mxu0 %v220
        %v1790 = vpop.f32.mrb[0].mxu0
        %v1791 = vadd.f32 %v1720, %v1790
        %v1792 = vpop.f32.mrb[0].mxu0
        %v1793 = vadd.f32 %v1722, %v1792
        %1794 = vdwg.mxu0
        %1795 = vmatprep.subr.mxu0 %v1004
        %1796 = vmatpush1.msra.mxu0 %v1003
        %1797 = vmatprep.subr.mxu0 %v1012
        %1798 = vmatpush1.msra.mxu0 %v1011
        %1799 = vmatprep.subr.mxu0 %v1020
        %1800 = vmatpush1.msra.mxu0 %v1019
        %1801 = vmatprep.subr.mxu0 %v1028
        %1802 = vmatpush1.msra.mxu0 %v1027
        %1803 = vmatprep.subr.mxu0 %v1036
        %1804 = vmatpush1.msra.mxu0 %v1035
        %1805 = vmatprep.subr.mxu0 %v1044
        %1806 = vmatpush1.msra.mxu0 %v1043
        %1807 = vmatprep.subr.mxu0 %v1052
        %1808 = vmatpush1.msra.mxu0 %v1051
        %1809 = vmatprep.subr.mxu0 %v1060
        %1810 = vmatpush1.msra.mxu0 %v1059
        %1811 = vmatprep.subr.mxu0 %v1068
        %1812 = vmatpush1.msra.mxu0 %v1067
        %1813 = vmatprep.subr.mxu0 %v1076
        %1814 = vmatpush1.msra.mxu0 %v1075
        %1815 = vmatprep.subr.mxu0 %v1084
        %1816 = vmatpush1.msra.mxu0 %v1083
        %1817 = vmatprep.subr.mxu0 %v1092
        %1818 = vmatpush1.msra.mxu0 %v1091
        %1819 = vmatprep.subr.mxu0 %v1100
        %1820 = vmatpush1.msra.mxu0 %v1099
        %1821 = vmatprep.subr.mxu0 %v1108
        %1822 = vmatpush1.msra.mxu0 %v1107
        %1823 = vmatprep.subr.mxu0 %v1116
        %1824 = vmatpush1.msra.mxu0 %v1115
        %1825 = vmatprep.subr.mxu0 %v1124
        %1826 = vmatpush1.msra.mxu0 %v1123
        %1827 = vmatprep.subr.mxu0 %v1132
        %1828 = vmatpush1.msra.mxu0 %v1131
        %1829 = vmatprep.subr.mxu0 %v1140
        %1830 = vmatpush1.msra.mxu0 %v1139
        %1831 = vmatprep.subr.mxu0 %v1148
        %1832 = vmatpush1.msra.mxu0 %v1147
        %1833 = vmatprep.subr.mxu0 %v1156
        %1834 = vmatpush1.msra.mxu0 %v1155
        %1835 = vmatprep.subr.mxu0 %v1164
        %1836 = vmatpush1.msra.mxu0 %v1163
        %1837 = vmatprep.subr.mxu0 %v1172
        %1838 = vmatpush1.msra.mxu0 %v1171
        %1839 = vmatprep.subr.mxu0 %v1180
        %1840 = vmatpush1.msra.mxu0 %v1179
        %1841 = vmatprep.subr.mxu0 %v1188
        %1842 = vmatpush1.msra.mxu0 %v1187
        %1843 = vmatprep.subr.mxu0 %v1196
        %1844 = vmatpush1.msra.mxu0 %v1195
        %1845 = vmatprep.subr.mxu0 %v1204
        %1846 = vmatpush1.msra.mxu0 %v1203
        %1847 = vmatprep.subr.mxu0 %v1212
        %1848 = vmatpush1.msra.mxu0 %v1211
        %1849 = vmatprep.subr.mxu0 %v1220
        %1850 = vmatpush1.msra.mxu0 %v1219
        %1851 = vmatprep.subr.mxu0 %v1228
        %1852 = vmatpush1.msra.mxu0 %v1227
        %1853 = vmatprep.subr.mxu0 %v1236
        %1854 = vmatpush1.msra.mxu0 %v1235
        %1855 = vmatprep.subr.mxu0 %v1244
        %1856 = vmatpush1.msra.mxu0 %v1243
        %1857 = vmatprep.subr.mxu0 %v1252
        %1858 = vmatpush1.msra.mxu0 %v1251
        %1859 = vmatprep.mubr.f32.mxu0 %v219
        %1860 = vmatmul.mubr.f32.gmra.mrb[0].mxu0 %v218
        %v1861 = vpop.f32.mrb[0].mxu0
        %v1862 = vadd.f32 0.0, %v1861
        %v1863 = vpop.f32.mrb[0].mxu0
        %v1864 = vadd.f32 0.0, %v1863
        %1865 = vdwg.mxu0
        %1866 = vmatprep.subr.mxu0 %v1260
        %1867 = vmatpush1.msra.mxu0 %v1259
        %1868 = vmatprep.subr.mxu0 %v1268
        %1869 = vmatpush1.msra.mxu0 %v1267
        %1870 = vmatprep.subr.mxu0 %v1276
        %1871 = vmatpush1.msra.mxu0 %v1275
        %1872 = vmatprep.subr.mxu0 %v1284
        %1873 = vmatpush1.msra.mxu0 %v1283
        %1874 = vmatprep.subr.mxu0 %v1292
        %1875 = vmatpush1.msra.mxu0 %v1291
        %1876 = vmatprep.subr.mxu0 %v1300
        %1877 = vmatpush1.msra.mxu0 %v1299
        %1878 = vmatprep.subr.mxu0 %v1308
        %1879 = vmatpush1.msra.mxu0 %v1307
        %1880 = vmatprep.subr.mxu0 %v1316
        %1881 = vmatpush1.msra.mxu0 %v1315
        %1882 = vmatprep.subr.mxu0 %v1324
        %1883 = vmatpush1.msra.mxu0 %v1323
        %1884 = vmatprep.subr.mxu0 %v1332
        %1885 = vmatpush1.msra.mxu0 %v1331
        %1886 = vmatprep.subr.mxu0 %v1340
        %1887 = vmatpush1.msra.mxu0 %v1339
        %1888 = vmatprep.subr.mxu0 %v1348
        %1889 = vmatpush1.msra.mxu0 %v1347
        %1890 = vmatprep.subr.mxu0 %v1356
        %1891 = vmatpush1.msra.mxu0 %v1355
        %1892 = vmatprep.subr.mxu0 %v1364
        %1893 = vmatpush1.msra.mxu0 %v1363
        %1894 = vmatprep.subr.mxu0 %v1372
        %1895 = vmatpush1.msra.mxu0 %v1371
        %1896 = vmatprep.subr.mxu0 %v1380
        %1897 = vmatpush1.msra.mxu0 %v1379
        %1898 = vmatprep.subr.mxu0 %v1388
        %1899 = vmatpush1.msra.mxu0 %v1387
        %1900 = vmatprep.subr.mxu0 %v1396
        %1901 = vmatpush1.msra.mxu0 %v1395
        %1902 = vmatprep.subr.mxu0 %v1404
        %1903 = vmatpush1.msra.mxu0 %v1403
        %1904 = vmatprep.subr.mxu0 %v1412
        %1905 = vmatpush1.msra.mxu0 %v1411
        %1906 = vmatprep.subr.mxu0 %v1420
        %1907 = vmatpush1.msra.mxu0 %v1419
        %1908 = vmatprep.subr.mxu0 %v1428
        %1909 = vmatpush1.msra.mxu0 %v1427
        %1910 = vmatprep.subr.mxu0 %v1436
        %1911 = vmatpush1.msra.mxu0 %v1435
        %1912 = vmatprep.subr.mxu0 %v1444
        %1913 = vmatpush1.msra.mxu0 %v1443
        %1914 = vmatprep.subr.mxu0 %v1452
        %1915 = vmatpush1.msra.mxu0 %v1451
        %1916 = vmatprep.subr.mxu0 %v1460
        %1917 = vmatpush1.msra.mxu0 %v1459
        %1918 = vmatprep.subr.mxu0 %v1468
        %1919 = vmatpush1.msra.mxu0 %v1467
        %1920 = vmatprep.subr.mxu0 %v1476
        %1921 = vmatpush1.msra.mxu0 %v1475
        %1922 = vmatprep.subr.mxu0 %v1484
        %1923 = vmatpush1.msra.mxu0 %v1483
        %1924 = vmatprep.subr.mxu0 %v1492
        %1925 = vmatpush1.msra.mxu0 %v1491
        %1926 = vmatprep.subr.mxu0 %v1500
        %1927 = vmatpush1.msra.mxu0 %v1499
        %1928 = vmatprep.subr.mxu0 %v1508
        %1929 = vmatpush1.msra.mxu0 %v1507
        %1930 = vmatprep.mubr.f32.mxu0 %v221
        %1931 = vmatmul.mubr.f32.gmra.mrb[0].mxu0 %v220
        %v1932 = vpop.f32.mrb[0].mxu0
        %v1933 = vadd.f32 %v1862, %v1932
        %v1934 = vpop.f32.mrb[0].mxu0
        %v1935 = vadd.f32 %v1864, %v1934
        %1936 = vdwg.mxu0
        %1937 = vmatprep.subr.mxu0 %v1006
        %1938 = vmatpush1.msra.mxu0 %v1005
        %1939 = vmatprep.subr.mxu0 %v1014
        %1940 = vmatpush1.msra.mxu0 %v1013
        %1941 = vmatprep.subr.mxu0 %v1022
        %1942 = vmatpush1.msra.mxu0 %v1021
        %1943 = vmatprep.subr.mxu0 %v1030
        %1944 = vmatpush1.msra.mxu0 %v1029
        %1945 = vmatprep.subr.mxu0 %v1038
        %1946 = vmatpush1.msra.mxu0 %v1037
        %1947 = vmatprep.subr.mxu0 %v1046
        %1948 = vmatpush1.msra.mxu0 %v1045
        %1949 = vmatprep.subr.mxu0 %v1054
        %1950 = vmatpush1.msra.mxu0 %v1053
        %1951 = vmatprep.subr.mxu0 %v1062
        %1952 = vmatpush1.msra.mxu0 %v1061
        %1953 = vmatprep.subr.mxu0 %v1070
        %1954 = vmatpush1.msra.mxu0 %v1069
        %1955 = vmatprep.subr.mxu0 %v1078
        %1956 = vmatpush1.msra.mxu0 %v1077
        %1957 = vmatprep.subr.mxu0 %v1086
        %1958 = vmatpush1.msra.mxu0 %v1085
        %1959 = vmatprep.subr.mxu0 %v1094
        %1960 = vmatpush1.msra.mxu0 %v1093
        %1961 = vmatprep.subr.mxu0 %v1102
        %1962 = vmatpush1.msra.mxu0 %v1101
        %1963 = vmatprep.subr.mxu0 %v1110
        %1964 = vmatpush1.msra.mxu0 %v1109
        %1965 = vmatprep.subr.mxu0 %v1118
        %1966 = vmatpush1.msra.mxu0 %v1117
        %1967 = vmatprep.subr.mxu0 %v1126
        %1968 = vmatpush1.msra.mxu0 %v1125
        %1969 = vmatprep.subr.mxu0 %v1134
        %1970 = vmatpush1.msra.mxu0 %v1133
        %1971 = vmatprep.subr.mxu0 %v1142
        %1972 = vmatpush1.msra.mxu0 %v1141
        %1973 = vmatprep.subr.mxu0 %v1150
        %1974 = vmatpush1.msra.mxu0 %v1149
        %1975 = vmatprep.subr.mxu0 %v1158
        %1976 = vmatpush1.msra.mxu0 %v1157
        %1977 = vmatprep.subr.mxu0 %v1166
        %1978 = vmatpush1.msra.mxu0 %v1165
        %1979 = vmatprep.subr.mxu0 %v1174
        %1980 = vmatpush1.msra.mxu0 %v1173
        %1981 = vmatprep.subr.mxu0 %v1182
        %1982 = vmatpush1.msra.mxu0 %v1181
        %1983 = vmatprep.subr.mxu0 %v1190
        %1984 = vmatpush1.msra.mxu0 %v1189
        %1985 = vmatprep.subr.mxu0 %v1198
        %1986 = vmatpush1.msra.mxu0 %v1197
        %1987 = vmatprep.subr.mxu0 %v1206
        %1988 = vmatpush1.msra.mxu0 %v1205
        %1989 = vmatprep.subr.mxu0 %v1214
        %1990 = vmatpush1.msra.mxu0 %v1213
        %1991 = vmatprep.subr.mxu0 %v1222
        %1992 = vmatpush1.msra.mxu0 %v1221
        %1993 = vmatprep.subr.mxu0 %v1230
        %1994 = vmatpush1.msra.mxu0 %v1229
        %1995 = vmatprep.subr.mxu0 %v1238
        %1996 = vmatpush1.msra.mxu0 %v1237
        %1997 = vmatprep.subr.mxu0 %v1246
        %1998 = vmatpush1.msra.mxu0 %v1245
        %1999 = vmatprep.subr.mxu0 %v1254
        %2000 = vmatpush1.msra.mxu0 %v1253
        %2001 = vmatprep.mubr.f32.mxu0 %v219
        %2002 = vmatmul.mubr.f32.gmra.mrb[0].mxu0 %v218
        %v2003 = vpop.f32.mrb[0].mxu0
        %v2004 = vadd.f32 0.0, %v2003
        %v2005 = vpop.f32.mrb[0].mxu0
        %v2006 = vadd.f32 0.0, %v2005
        %2007 = vdwg.mxu0
        %2008 = vmatprep.subr.mxu0 %v1262
        %2009 = vmatpush1.msra.mxu0 %v1261
        %2010 = vmatprep.subr.mxu0 %v1270
        %2011 = vmatpush1.msra.mxu0 %v1269
        %2012 = vmatprep.subr.mxu0 %v1278
        %2013 = vmatpush1.msra.mxu0 %v1277
        %2014 = vmatprep.subr.mxu0 %v1286
        %2015 = vmatpush1.msra.mxu0 %v1285
        %2016 = vmatprep.subr.mxu0 %v1294
        %2017 = vmatpush1.msra.mxu0 %v1293
        %2018 = vmatprep.subr.mxu0 %v1302
        %2019 = vmatpush1.msra.mxu0 %v1301
        %2020 = vmatprep.subr.mxu0 %v1310
        %2021 = vmatpush1.msra.mxu0 %v1309
        %2022 = vmatprep.subr.mxu0 %v1318
        %2023 = vmatpush1.msra.mxu0 %v1317
        %2024 = vmatprep.subr.mxu0 %v1326
        %2025 = vmatpush1.msra.mxu0 %v1325
        %2026 = vmatprep.subr.mxu0 %v1334
        %2027 = vmatpush1.msra.mxu0 %v1333
        %2028 = vmatprep.subr.mxu0 %v1342
        %2029 = vmatpush1.msra.mxu0 %v1341
        %2030 = vmatprep.subr.mxu0 %v1350
        %2031 = vmatpush1.msra.mxu0 %v1349
        %2032 = vmatprep.subr.mxu0 %v1358
        %2033 = vmatpush1.msra.mxu0 %v1357
        %2034 = vmatprep.subr.mxu0 %v1366
        %2035 = vmatpush1.msra.mxu0 %v1365
        %2036 = vmatprep.subr.mxu0 %v1374
        %2037 = vmatpush1.msra.mxu0 %v1373
        %2038 = vmatprep.subr.mxu0 %v1382
        %2039 = vmatpush1.msra.mxu0 %v1381
        %2040 = vmatprep.subr.mxu0 %v1390
        %2041 = vmatpush1.msra.mxu0 %v1389
        %2042 = vmatprep.subr.mxu0 %v1398
        %2043 = vmatpush1.msra.mxu0 %v1397
        %2044 = vmatprep.subr.mxu0 %v1406
        %2045 = vmatpush1.msra.mxu0 %v1405
        %2046 = vmatprep.subr.mxu0 %v1414
        %2047 = vmatpush1.msra.mxu0 %v1413
        %2048 = vmatprep.subr.mxu0 %v1422
        %2049 = vmatpush1.msra.mxu0 %v1421
        %2050 = vmatprep.subr.mxu0 %v1430
        %2051 = vmatpush1.msra.mxu0 %v1429
        %2052 = vmatprep.subr.mxu0 %v1438
        %2053 = vmatpush1.msra.mxu0 %v1437
        %2054 = vmatprep.subr.mxu0 %v1446
        %2055 = vmatpush1.msra.mxu0 %v1445
        %2056 = vmatprep.subr.mxu0 %v1454
        %2057 = vmatpush1.msra.mxu0 %v1453
        %2058 = vmatprep.subr.mxu0 %v1462
        %2059 = vmatpush1.msra.mxu0 %v1461
        %2060 = vmatprep.subr.mxu0 %v1470
        %2061 = vmatpush1.msra.mxu0 %v1469
        %2062 = vmatprep.subr.mxu0 %v1478
        %2063 = vmatpush1.msra.mxu0 %v1477
        %2064 = vmatprep.subr.mxu0 %v1486
        %2065 = vmatpush1.msra.mxu0 %v1485
        %2066 = vmatprep.subr.mxu0 %v1494
        %2067 = vmatpush1.msra.mxu0 %v1493
        %2068 = vmatprep.subr.mxu0 %v1502
        %2069 = vmatpush1.msra.mxu0 %v1501
        %2070 = vmatprep.subr.mxu0 %v1510
        %2071 = vmatpush1.msra.mxu0 %v1509
        %2072 = vmatprep.mubr.f32.mxu0 %v221
        %2073 = vmatmul.mubr.f32.gmra.mrb[0].mxu0 %v220
        %v2074 = vpop.f32.mrb[0].mxu0
        %v2075 = vadd.f32 %v2004, %v2074
        %v2076 = vpop.f32.mrb[0].mxu0
        %v2077 = vadd.f32 %v2006, %v2076
        %2078 = vdwg.mxu0
        %v2079 = vld [vmem:[%s185] sm:$0xff]
        %v2080 = vld [vmem:[%s185 + $0x8] sm:$0xff]
        %v2081 = vld [vmem:[%s185 + $0x10] sm:$0xff]
        %v2082 = vld [vmem:[%s185 + $0x18] sm:$0xff]
        %v2083 = vld [vmem:[%s185 + $0x20] sm:$0xff]
        %v2084 = vld [vmem:[%s185 + $0x28] sm:$0xff]
        %v2085 = vld [vmem:[%s185 + $0x30] sm:$0xff]
        %v2086 = vld [vmem:[%s185 + $0x38] sm:$0xff]
        %v2087 = vadd.f32 %v2079, %v1649
        %v2088 = vadd.f32 %v2080, %v1651
        %v2089 = vadd.f32 %v2081, %v1791
        %v2090 = vadd.f32 %v2082, %v1793
        %v2091 = vadd.f32 %v2083, %v1933
        %v2092 = vadd.f32 %v2084, %v1935
        %v2093 = vadd.f32 %v2085, %v2075
        %v2094 = vadd.f32 %v2086, %v2077
        %2095 = vst [vmem:[%s185] sm:$0xff] %v2087
        %2096 = vst [vmem:[%s185 + $0x8] sm:$0xff] %v2088
        %2097 = vst [vmem:[%s185 + $0x10] sm:$0xff] %v2089
        %2098 = vst [vmem:[%s185 + $0x18] sm:$0xff] %v2090
        %2099 = vst [vmem:[%s185 + $0x20] sm:$0xff] %v2091
        %2100 = vst [vmem:[%s185 + $0x28] sm:$0xff] %v2092
        %2101 = vst [vmem:[%s185 + $0x30] sm:$0xff] %v2093
        %2102 = vst [vmem:[%s185 + $0x38] sm:$0xff] %v2094
        // Predicated region
        $region33: #{tpu_custom_call.1} parent=27 // pred_check
          %p2103 = pneg %p206
        $region34: #{tpu_custom_call.1} parent=27 // pred_check_branch
          %2105 = sbr.rel (%p2103) target = $region36
        $region35: #{tpu_custom_call.1} parent=27 // pred_region
          %v2106 = vld [vmem:[%s185] sm:$0xff]
          %v2107 = vld [vmem:[%s185 + $0x8] sm:$0xff]
          %v2108 = vld [vmem:[%s185 + $0x10] sm:$0xff]
          %v2109 = vld [vmem:[%s185 + $0x18] sm:$0xff]
          %v2110 = vld [vmem:[%s185 + $0x20] sm:$0xff]
          %v2111 = vld [vmem:[%s185 + $0x28] sm:$0xff]
          %v2112 = vld [vmem:[%s185 + $0x30] sm:$0xff]
          %v2113 = vld [vmem:[%s185 + $0x38] sm:$0xff]
          %v2114 = vmax.f32 %v2106, 1.0
          %v2115 = vmax.f32 %v2107, 1.0
          %v2116 = vmax.f32 %v2108, 1.0
          %v2117 = vmax.f32 %v2109, 1.0
          %v2118 = vmax.f32 %v2110, 1.0
          %v2119 = vmax.f32 %v2111, 1.0
          %v2120 = vmax.f32 %v2112, 1.0
          %v2121 = vmax.f32 %v2113, 1.0
          %v2122 = vrcp.pop %v2114
          %v2123 = vmul.f32 1.0, %v2122
          %v2124 = vrcp.pop %v2115
          %v2125 = vmul.f32 1.0, %v2124
          %v2126 = vrcp.pop %v2116
          %v2127 = vmul.f32 1.0, %v2126
          %v2128 = vrcp.pop %v2117
          %v2129 = vmul.f32 1.0, %v2128
          %v2130 = vrcp.pop %v2118
          %v2131 = vmul.f32 1.0, %v2130
          %v2132 = vrcp.pop %v2119
          %v2133 = vmul.f32 1.0, %v2132
          %v2134 = vrcp.pop %v2120
          %v2135 = vmul.f32 1.0, %v2134
          %v2136 = vrcp.pop %v2121
          %v2137 = vmul.f32 1.0, %v2136
          %v2138 = vlaneseq
          %v2139 = vshrl.u32 %v2138, 7
          %v2140 = vsub.s32 6, %v2139
          %v2141 = vrot.slane %v2123, %v2140
          %v2142 = vlaneseq
          %v2143 = vshrl.u32 %v2142, 7
          %v2144 = vsub.s32 6, %v2143
          %v2145 = vrot.slane %v2125, %v2144
          %v2146 = vlaneseq
          %v2147 = vshrl.u32 %v2146, 7
          %v2148 = vsub.s32 6, %v2147
          %v2149 = vrot.slane %v2127, %v2148
          %v2150 = vlaneseq
          %v2151 = vshrl.u32 %v2150, 7
          %v2152 = vsub.s32 6, %v2151
          %v2153 = vrot.slane %v2129, %v2152
          %v2154 = vlaneseq
          %v2155 = vshrl.u32 %v2154, 7
          %v2156 = vsub.s32 6, %v2155
          %v2157 = vrot.slane %v2131, %v2156
          %v2158 = vlaneseq
          %v2159 = vshrl.u32 %v2158, 7
          %v2160 = vsub.s32 6, %v2159
          %v2161 = vrot.slane %v2133, %v2160
          %v2162 = vlaneseq
          %v2163 = vshrl.u32 %v2162, 7
          %v2164 = vsub.s32 6, %v2163
          %v2165 = vrot.slane %v2135, %v2164
          %v2166 = vlaneseq
          %v2167 = vshrl.u32 %v2166, 7
          %v2168 = vsub.s32 6, %v2167
          %v2169 = vrot.slane %v2137, %v2168
          %v2170 = vmul.f32 %v2106, %v2141
          %v2171 = vmul.f32 %v2107, %v2145
          %v2172 = vmul.f32 %v2108, %v2149
          %v2173 = vmul.f32 %v2109, %v2153
          %v2174 = vmul.f32 %v2110, %v2157
          %v2175 = vmul.f32 %v2111, %v2161
          %v2176 = vmul.f32 %v2112, %v2165
          %v2177 = vmul.f32 %v2113, %v2169
          %2178 = vst [vmem:[%s185] sm:$0xff] %v2170
          %2179 = vst [vmem:[%s185 + $0x8] sm:$0xff] %v2171
          %2180 = vst [vmem:[%s185 + $0x10] sm:$0xff] %v2172
          %2181 = vst [vmem:[%s185 + $0x18] sm:$0xff] %v2173
          %2182 = vst [vmem:[%s185 + $0x20] sm:$0xff] %v2174
          %2183 = vst [vmem:[%s185 + $0x28] sm:$0xff] %v2175
          %2184 = vst [vmem:[%s185 + $0x30] sm:$0xff] %v2176
          %2185 = vst [vmem:[%s185 + $0x38] sm:$0xff] %v2177
        $region36: #{tpu_custom_call.1} parent=27 // pred_fallthru
          _
        %s2186 = sand.u32 %s92, 1
        %s2187 = scalar_lea.sflag [#allocation3], %s2186
        %s2188 = sand.u32 %s92, 1
        %s2189 = smul.addr %s2188, 64
        %s2190 = scalar_lea.vmem [#allocation2], %s2189
        // Predicated region
        $region37: #{tpu_custom_call.1} parent=27 // pred_check
          %p2191 = pneg %p102
        $region38: #{tpu_custom_call.1} parent=27 // pred_check_branch
          %2193 = sbr.rel (%p2191) target = $region40
        $region39: #{tpu_custom_call.1} parent=27 // pred_region
          %s2195 = ssub.s32 1024, 1024
          %2196 = vsyncadd %s2187, %s2195
          %s2197 = smul.addr %s20, 8
          %s2198 = smul.addr %s2197, 128
          %s2199 = scalar_lea.hbm %s2, %s2198
          %s2201 = sshll.u32 %s2190, 4
          %s2202 = int_to_ptr.vmem [resolvable:$true] %s2201
          %2204 = dma.vmem_to_hbm [thread:$0]  %s2202, 1024, %s2199, %s2187
        $region40: #{tpu_custom_call.1} parent=27 // pred_fallthru
          _
      $region28: #{tpu_custom_call.1} parent=5 // pred_fallthru
        _
      %p2205 = scmp.le.s32.totalorder 2, %s11
      // Predicated region
      $region41: #{tpu_custom_call.1} parent=5 // pred_check
        %p2206 = pneg %p2205
      $region42: #{tpu_custom_call.1} parent=5 // pred_check_branch
        %2208 = sbr.rel (%p2206) target = $region44
      $region43: #{tpu_custom_call.1} parent=5 // pred_region
        %s2209 = ssub.s32 %s11, 2
        // Predicated region
        $region45: #{tpu_custom_call.1} parent=43 // pred_check
          %p2210 = pneg %p108
        $region46: #{tpu_custom_call.1} parent=43 // pred_check_branch
          %2212 = sbr.rel (%p2210) target = $region48
        $region47: #{tpu_custom_call.1} parent=43 // pred_region
          %s2213 = sand.u32 %s93, 1
          %s2214 = scalar_lea.sflag [#allocation3], %s2213
          %s2215 = sand.u32 %s93, 1
          %s2216 = smul.addr %s2215, 64
          %s2217 = scalar_lea.vmem [#allocation2], %s2216
          %2218 = dma.done %s2214, 1024
        $region48: #{tpu_custom_call.1} parent=43 // pred_fallthru
          _
      $region44: #{tpu_custom_call.1} parent=5 // pred_fallthru
        _
    $region6: #{tpu_custom_call.1} parent=1 // loop_footer
      %s15 = sadd.s32 1, %s11
    $region7: #{tpu_custom_call.1} parent=1 // loop_footer_branch
      %10 = sbr.rel target = $region3
    $region8: #{tpu_custom_call.1} parent=1 // loop_exit
      _
    %2219 = vsyncpa [#allocation3], 1
    %s2220 = scalar_lea.sflag [#allocation3], 1
    %2221 = vsyncpa %s2220, 1

</llo_original>
